<compile_context>
chip_gen: v5e
topology: v5e:2x2
jax: 0.10.0
libtpu: 0.0.40
codegen_flags: <defaults>
</compile_context>

<pallas_src>
import jax
import jax.numpy as jnp
from jax import lax
from jax.experimental import pallas as pl
from jax.experimental.pallas import tpu as pltpu


def voyager_kernel(ids_ref, gate_tab_ref, whh_ref, lw_ref, lb_ref, out_ref, gx_ref):
    """Single-invocation kernel: fused embedding gather + LSTM recurrence + linear.

    ids_ref      : (B, T)    int32 token ids, SMEM (scalar reads only)
    gate_tab_ref : (V, 4H)   precomputed  emb_table @ W_ih' + b'  (i/f/o cols *0.5)
    whh_ref      : (H, 4H)   hidden->gates weights (i/f/o cols pre-scaled by 0.5)
    lw_ref       : (H, Cp)   final linear weights (classes padded to 128 lanes)
    lb_ref       : (1, Cp)   final linear bias
    out_ref      : (Bp, Cp)  logits (padded batch rows / classes sliced off outside)
    gx_ref       : (T*Bp, 4H) VMEM scratch holding the gathered per-step gate inputs
    """
    B, T = ids_ref.shape
    Bp = out_ref.shape[0]
    H = whh_ref.shape[0]

    # ---- fused embedding gather -------------------------------------------
    # The whole input projection x @ W_ih + b collapsed into a row gather of the
    # precomputed gate table.  Rows are (1, 4H) = (1, 128): lane-dense loads.
    # Padded batch rows (b >= B) just reuse the last real row; their h/c are
    # garbage and are sliced off in the wrapper (no in-kernel batch reduction).
    for t in range(T):
        for b in range(Bp):
            bb = min(b, B - 1)                       # static clamp for padded rows
            tok = ids_ref[bb, t]                     # SMEM scalar read
            gx_ref[pl.ds(t * Bp + b, 1), :] = gate_tab_ref[pl.ds(tok, 1), :]

    whh = whh_ref[...]                               # (H, 4H), loaded once

    h = jnp.zeros((Bp, H), jnp.float32)
    c = jnp.zeros((Bp, H), jnp.float32)

    # Fully unrolled recurrence: only h @ W_hh + one tanh pass remain on the
    # serial h->h critical path.  precision pinned explicitly (review item):
    # DEFAULT = native single-pass MXU path, same as the XLA reference.
    for t in range(T):
        gates = gx_ref[t * Bp:(t + 1) * Bp, :] + jnp.dot(
            h, whh, preferred_element_type=jnp.float32,
            precision=jax.lax.Precision.DEFAULT)      # (Bp, 4H)
        tt = jnp.tanh(gates)          # single EUP pass over the full 4H lanes
        sg = 0.5 * tt + 0.5           # sigmoid of the *unscaled* i/f/o pre-acts
        i_g = sg[:, 0 * H:1 * H]
        f_g = sg[:, 1 * H:2 * H]
        g_g = tt[:, 2 * H:3 * H]
        o_g = sg[:, 3 * H:4 * H]
        c = f_g * c + i_g * g_g
        h = o_g * jnp.tanh(c)

    # lstm_drop is identity in eval; out = relu(h_T) @ W_lin^T + b_lin
    out_ref[...] = (jnp.dot(jnp.maximum(h, 0.0), lw_ref[...],
                            preferred_element_type=jnp.float32,
                            precision=jax.lax.Precision.DEFAULT)
                    + lb_ref[...])


def voyager_forward(X, kparams):
    """X: (B, T) int32 token ids.  Returns (B, C) float32 logits."""
    gate_tab = kparams["gate_tab"]
    whh = kparams["whh"]
    lw = kparams["lw"]
    lb = kparams["lb"]
    C = kparams["n_classes"]

    B, T = X.shape
    G = whh.shape[1]                       # 4H
    Cp = lw.shape[1]                       # padded class count (multiple of 128)
    Bp = ((B + 7) // 8) * 8                # pad batch (sublane) dim -> unmasked tiles

    out = pl.pallas_call(
        voyager_kernel,
        out_shape=jax.ShapeDtypeStruct((Bp, Cp), jnp.float32),
        in_specs=[
            pl.BlockSpec(memory_space=pltpu.MemorySpace.SMEM),   # token ids
            pl.BlockSpec(memory_space=pltpu.MemorySpace.VMEM),   # gate table
            pl.BlockSpec(memory_space=pltpu.MemorySpace.VMEM),   # W_hh'
            pl.BlockSpec(memory_space=pltpu.MemorySpace.VMEM),   # lin W
            pl.BlockSpec(memory_space=pltpu.MemorySpace.VMEM),   # lin b
        ],
        out_specs=pl.BlockSpec(memory_space=pltpu.MemorySpace.VMEM),
        scratch_shapes=[pltpu.VMEM((T * Bp, G), jnp.float32)],   # gathered gate inputs
    )(X.astype(jnp.int32), gate_tab, whh, lw, lb)
    return out[:B, :C]


def init_params(key, num_classes, embed_dim, hidden_dim, n_deltas):
    """Deterministic synthetic parameters in PyTorch layouts (gate order [i,f,g,o])."""
    c = num_classes + 2 * n_deltas + 1
    keys = jax.random.split(key, 7)
    k = 1.0 / jnp.sqrt(jnp.float32(hidden_dim))
    emb_table = jax.random.normal(keys[0], (c, embed_dim), jnp.float32)
    w_ih = jax.random.uniform(keys[1], (4 * hidden_dim, embed_dim), jnp.float32, -k, k)
    w_hh = jax.random.uniform(keys[2], (4 * hidden_dim, hidden_dim), jnp.float32, -k, k)
    b_ih = jax.random.uniform(keys[3], (4 * hidden_dim,), jnp.float32, -k, k)
    b_hh = jax.random.uniform(keys[4], (4 * hidden_dim,), jnp.float32, -k, k)
    lin_w = jax.random.uniform(keys[5], (c, hidden_dim), jnp.float32, -k, k)
    lin_b = jax.random.uniform(keys[6], (c,), jnp.float32, -k, k)
    return (emb_table, w_ih, w_hh, b_ih, b_hh, lin_w, lin_b)


def prepare_kernel_params(pt_params, hidden_dim):
    """PyTorch-layout params -> kernel layout (done once, pure weight prep).

    * transpose to (in, out) so the kernel does row-major x @ W matmuls
    * fold b_ih + b_hh into one bias
    * fold the 0.5 'sigmoid-as-tanh' scale into the i/f/o gate columns
    * fold the input projection into the embedding table:
        gate_tab[v] = emb_table[v] @ W_ih' + b'   (in-kernel gather replaces matmul)
    * pad the class dim to a multiple of 128 so the output store stays lane-dense
    """
    emb_table, w_ih, w_hh, b_ih, b_hh, lin_w, lin_b = pt_params
    H = hidden_dim
    C = lin_w.shape[0]

    wih_t = w_ih.T                                   # (E, 4H)
    whh_t = w_hh.T                                   # (H, 4H)
    bias = (b_ih + b_hh)[None, :]                    # (1, 4H)

    # sigmoid(z) = 0.5 * tanh(z / 2) + 0.5  ->  pre-scale i/f/o columns by 0.5
    # (exact power-of-two scaling) so the kernel needs ONE tanh pass per step.
    scale = jnp.concatenate([
        jnp.full((H,), 0.5, jnp.float32),            # i
        jnp.full((H,), 0.5, jnp.float32),            # f
        jnp.ones((H,), jnp.float32),                 # g (kept at full scale)
        jnp.full((H,), 0.5, jnp.float32),            # o
    ])[None, :]
    wih_s = wih_t * scale
    whh_s = whh_t * scale
    bias_s = bias * scale

    # Parameter product: the per-token input projection becomes a table lookup.
    gate_tab = emb_table @ wih_s + bias_s            # (vocab, 4H)

    # Lane-dense output: pad classes to a multiple of 128 (no-op when C = 128).
    Cp = ((C + 127) // 128) * 128
    lw = lin_w.T                                     # (H, C)
    lb = lin_b[None, :]                              # (1, C)
    if Cp != C:
        lw = jnp.pad(lw, ((0, 0), (0, Cp - C)))
        lb = jnp.pad(lb, ((0, 0), (0, Cp - C)))

    return dict(gate_tab=gate_tab, whh=whh_s, lw=lw, lb=lb, n_classes=C)


def voyager_reference(X, pt_params):
    """Pure-JAX reference matching PyTorch nn.Embedding + nn.LSTM + nn.Linear."""
    emb_table, w_ih, w_hh, b_ih, b_hh, lin_w, lin_b = pt_params
    H = w_hh.shape[1]
    emb = emb_table[X]                               # (B, T, E)
    B = emb.shape[0]
    wih_t, whh_t = w_ih.T, w_hh.T
    bias = b_ih + b_hh

    def step(carry, x_t):
        h, c = carry
        gates = x_t @ wih_t + h @ whh_t + bias
        i_g = jax.nn.sigmoid(gates[:, 0 * H:1 * H])
        f_g = jax.nn.sigmoid(gates[:, 1 * H:2 * H])
        g_g = jnp.tanh(gates[:, 2 * H:3 * H])
        o_g = jax.nn.sigmoid(gates[:, 3 * H:4 * H])
        c_new = f_g * c + i_g * g_g
        h_new = o_g * jnp.tanh(c_new)
        return (h_new, c_new), None

    h0 = jnp.zeros((B, H), jnp.float32)
    c0 = jnp.zeros((B, H), jnp.float32)
    (h_T, _), _ = lax.scan(step, (h0, c0), jnp.transpose(emb, (1, 0, 2)))
    return jnp.maximum(h_T, 0.0) @ lin_w.T + lin_b


if __name__ == "__main__":
    # Small shapes consistent with the module: vocab = num_classes + 2*n_deltas + 1
    num_classes, n_deltas = 95, 16       # -> C = 128 output classes / vocab size
    embed_dim, hidden_dim = 32, 32
    B, T = 4, 8

    key = jax.random.PRNGKey(0)
    pkey, xkey = jax.random.split(key)
    pt_params = init_params(pkey, num_classes, embed_dim, hidden_dim, n_deltas)
    kparams = prepare_kernel_params(pt_params, hidden_dim)
    C = num_classes + 2 * n_deltas + 1
    X = jax.random.randint(xkey, (B, T), 0, C, dtype=jnp.int32)

    out = jax.block_until_ready(voyager_forward(X, kparams))
    ref = jax.block_until_ready(voyager_reference(X, pt_params))

    assert out.shape == (B, C), out.shape
    # Tolerance relaxed deliberately: the sigmoid->tanh reformulation and the
    # folded gate table change rounding only at the approximation / ulp level.
    assert jnp.allclose(out, ref, atol=1e-3, rtol=1e-3), \
        f"max abs err {jnp.max(jnp.abs(out - ref))}"

    print("KERNEL_OK")
</pallas_src>

<mosaic_0001>
module attributes {stable_mosaic.version = 11 : i64} {
  func.func @voyager_kernel(%arg0: memref<4x8xi32, #tpu.memory_space<smem>>, %arg1: memref<128x128xf32, #tpu.memory_space<vmem>>, %arg2: memref<32x128xf32, #tpu.memory_space<vmem>>, %arg3: memref<32x128xf32, #tpu.memory_space<vmem>>, %arg4: memref<1x128xf32, #tpu.memory_space<vmem>>, %arg5: memref<8x128xf32, #tpu.memory_space<vmem>>, %arg6: memref<64x128xf32, #tpu.memory_space<vmem>>) attributes {dimension_semantics = [], scalar_prefetch = 0 : i64, scratch_operands = 1 : i64, tpu.core_type = #tpu.core_type<tc>} {
    %c0 = arith.constant 0 : index
    %c0_0 = arith.constant 0 : index
    %0 = memref.load %arg0[%c0, %c0_0] : memref<4x8xi32, #tpu.memory_space<smem>>
    %1 = arith.index_cast %0 : i32 to index
    %c0_1 = arith.constant 0 : index
    %2 = vector.load %arg1[%1, %c0_1] : memref<128x128xf32, #tpu.memory_space<vmem>>, vector<1x128xf32>
    %c0_2 = arith.constant 0 : index
    %c0_3 = arith.constant 0 : index
    %3 = vector.load %arg6[%c0_2, %c0_3] : memref<64x128xf32, #tpu.memory_space<vmem>>, vector<1x128xf32>
    tpu.vector_store %arg6[%c0_2, %c0_3], %2 {strides = array<i32>} : memref<64x128xf32, #tpu.memory_space<vmem>>, vector<1x128xf32>,
    %c1 = arith.constant 1 : index
    %c0_4 = arith.constant 0 : index
    %4 = memref.load %arg0[%c1, %c0_4] : memref<4x8xi32, #tpu.memory_space<smem>>
    %5 = arith.index_cast %4 : i32 to index
    %c0_5 = arith.constant 0 : index
    %6 = vector.load %arg1[%5, %c0_5] : memref<128x128xf32, #tpu.memory_space<vmem>>, vector<1x128xf32>
    %c1_6 = arith.constant 1 : index
    %c0_7 = arith.constant 0 : index
    %7 = vector.load %arg6[%c1_6, %c0_7] : memref<64x128xf32, #tpu.memory_space<vmem>>, vector<1x128xf32>
    tpu.vector_store %arg6[%c1_6, %c0_7], %6 {strides = array<i32>} : memref<64x128xf32, #tpu.memory_space<vmem>>, vector<1x128xf32>,
    %c2 = arith.constant 2 : index
    %c0_8 = arith.constant 0 : index
    %8 = memref.load %arg0[%c2, %c0_8] : memref<4x8xi32, #tpu.memory_space<smem>>
    %9 = arith.index_cast %8 : i32 to index
    %c0_9 = arith.constant 0 : index
    %10 = vector.load %arg1[%9, %c0_9] : memref<128x128xf32, #tpu.memory_space<vmem>>, vector<1x128xf32>
    %c2_10 = arith.constant 2 : index
    %c0_11 = arith.constant 0 : index
    %11 = vector.load %arg6[%c2_10, %c0_11] : memref<64x128xf32, #tpu.memory_space<vmem>>, vector<1x128xf32>
    tpu.vector_store %arg6[%c2_10, %c0_11], %10 {strides = array<i32>} : memref<64x128xf32, #tpu.memory_space<vmem>>, vector<1x128xf32>,
    %c3 = arith.constant 3 : index
    %c0_12 = arith.constant 0 : index
    %12 = memref.load %arg0[%c3, %c0_12] : memref<4x8xi32, #tpu.memory_space<smem>>
    %13 = arith.index_cast %12 : i32 to index
    %c0_13 = arith.constant 0 : index
    %14 = vector.load %arg1[%13, %c0_13] : memref<128x128xf32, #tpu.memory_space<vmem>>, vector<1x128xf32>
    %c3_14 = arith.constant 3 : index
    %c0_15 = arith.constant 0 : index
    %15 = vector.load %arg6[%c3_14, %c0_15] : memref<64x128xf32, #tpu.memory_space<vmem>>, vector<1x128xf32>
    tpu.vector_store %arg6[%c3_14, %c0_15], %14 {strides = array<i32>} : memref<64x128xf32, #tpu.memory_space<vmem>>, vector<1x128xf32>,
    %c3_16 = arith.constant 3 : index
    %c0_17 = arith.constant 0 : index
    %16 = memref.load %arg0[%c3_16, %c0_17] : memref<4x8xi32, #tpu.memory_space<smem>>
    %17 = arith.index_cast %16 : i32 to index
    %c0_18 = arith.constant 0 : index
    %18 = vector.load %arg1[%17, %c0_18] : memref<128x128xf32, #tpu.memory_space<vmem>>, vector<1x128xf32>
    %c4 = arith.constant 4 : index
    %c0_19 = arith.constant 0 : index
    %19 = vector.load %arg6[%c4, %c0_19] : memref<64x128xf32, #tpu.memory_space<vmem>>, vector<1x128xf32>
    tpu.vector_store %arg6[%c4, %c0_19], %18 {strides = array<i32>} : memref<64x128xf32, #tpu.memory_space<vmem>>, vector<1x128xf32>,
    %c3_20 = arith.constant 3 : index
    %c0_21 = arith.constant 0 : index
    %20 = memref.load %arg0[%c3_20, %c0_21] : memref<4x8xi32, #tpu.memory_space<smem>>
    %21 = arith.index_cast %20 : i32 to index
    %c0_22 = arith.constant 0 : index
    %22 = vector.load %arg1[%21, %c0_22] : memref<128x128xf32, #tpu.memory_space<vmem>>, vector<1x128xf32>
    %c5 = arith.constant 5 : index
    %c0_23 = arith.constant 0 : index
    %23 = vector.load %arg6[%c5, %c0_23] : memref<64x128xf32, #tpu.memory_space<vmem>>, vector<1x128xf32>
    tpu.vector_store %arg6[%c5, %c0_23], %22 {strides = array<i32>} : memref<64x128xf32, #tpu.memory_space<vmem>>, vector<1x128xf32>,
    %c3_24 = arith.constant 3 : index
    %c0_25 = arith.constant 0 : index
    %24 = memref.load %arg0[%c3_24, %c0_25] : memref<4x8xi32, #tpu.memory_space<smem>>
    %25 = arith.index_cast %24 : i32 to index
    %c0_26 = arith.constant 0 : index
    %26 = vector.load %arg1[%25, %c0_26] : memref<128x128xf32, #tpu.memory_space<vmem>>, vector<1x128xf32>
    %c6 = arith.constant 6 : index
    %c0_27 = arith.constant 0 : index
    %27 = vector.load %arg6[%c6, %c0_27] : memref<64x128xf32, #tpu.memory_space<vmem>>, vector<1x128xf32>
    tpu.vector_store %arg6[%c6, %c0_27], %26 {strides = array<i32>} : memref<64x128xf32, #tpu.memory_space<vmem>>, vector<1x128xf32>,
    %c3_28 = arith.constant 3 : index
    %c0_29 = arith.constant 0 : index
    %28 = memref.load %arg0[%c3_28, %c0_29] : memref<4x8xi32, #tpu.memory_space<smem>>
    %29 = arith.index_cast %28 : i32 to index
    %c0_30 = arith.constant 0 : index
    %30 = vector.load %arg1[%29, %c0_30] : memref<128x128xf32, #tpu.memory_space<vmem>>, vector<1x128xf32>
    %c7 = arith.constant 7 : index
    %c0_31 = arith.constant 0 : index
    %31 = vector.load %arg6[%c7, %c0_31] : memref<64x128xf32, #tpu.memory_space<vmem>>, vector<1x128xf32>
    tpu.vector_store %arg6[%c7, %c0_31], %30 {strides = array<i32>} : memref<64x128xf32, #tpu.memory_space<vmem>>, vector<1x128xf32>,
    %c0_32 = arith.constant 0 : index
    %c1_33 = arith.constant 1 : index
    %32 = memref.load %arg0[%c0_32, %c1_33] : memref<4x8xi32, #tpu.memory_space<smem>>
    %33 = arith.index_cast %32 : i32 to index
    %c0_34 = arith.constant 0 : index
    %34 = vector.load %arg1[%33, %c0_34] : memref<128x128xf32, #tpu.memory_space<vmem>>, vector<1x128xf32>
    %c8 = arith.constant 8 : index
    %c0_35 = arith.constant 0 : index
    %35 = vector.load %arg6[%c8, %c0_35] : memref<64x128xf32, #tpu.memory_space<vmem>>, vector<1x128xf32>
    tpu.vector_store %arg6[%c8, %c0_35], %34 {strides = array<i32>} : memref<64x128xf32, #tpu.memory_space<vmem>>, vector<1x128xf32>,
    %c1_36 = arith.constant 1 : index
    %c1_37 = arith.constant 1 : index
    %36 = memref.load %arg0[%c1_36, %c1_37] : memref<4x8xi32, #tpu.memory_space<smem>>
    %37 = arith.index_cast %36 : i32 to index
    %c0_38 = arith.constant 0 : index
    %38 = vector.load %arg1[%37, %c0_38] : memref<128x128xf32, #tpu.memory_space<vmem>>, vector<1x128xf32>
    %c9 = arith.constant 9 : index
    %c0_39 = arith.constant 0 : index
    %39 = vector.load %arg6[%c9, %c0_39] : memref<64x128xf32, #tpu.memory_space<vmem>>, vector<1x128xf32>
    tpu.vector_store %arg6[%c9, %c0_39], %38 {strides = array<i32>} : memref<64x128xf32, #tpu.memory_space<vmem>>, vector<1x128xf32>,
    %c2_40 = arith.constant 2 : index
    %c1_41 = arith.constant 1 : index
    %40 = memref.load %arg0[%c2_40, %c1_41] : memref<4x8xi32, #tpu.memory_space<smem>>
    %41 = arith.index_cast %40 : i32 to index
    %c0_42 = arith.constant 0 : index
    %42 = vector.load %arg1[%41, %c0_42] : memref<128x128xf32, #tpu.memory_space<vmem>>, vector<1x128xf32>
    %c10 = arith.constant 10 : index
    %c0_43 = arith.constant 0 : index
    %43 = vector.load %arg6[%c10, %c0_43] : memref<64x128xf32, #tpu.memory_space<vmem>>, vector<1x128xf32>
    tpu.vector_store %arg6[%c10, %c0_43], %42 {strides = array<i32>} : memref<64x128xf32, #tpu.memory_space<vmem>>, vector<1x128xf32>,
    %c3_44 = arith.constant 3 : index
    %c1_45 = arith.constant 1 : index
    %44 = memref.load %arg0[%c3_44, %c1_45] : memref<4x8xi32, #tpu.memory_space<smem>>
    %45 = arith.index_cast %44 : i32 to index
    %c0_46 = arith.constant 0 : index
    %46 = vector.load %arg1[%45, %c0_46] : memref<128x128xf32, #tpu.memory_space<vmem>>, vector<1x128xf32>
    %c11 = arith.constant 11 : index
    %c0_47 = arith.constant 0 : index
    %47 = vector.load %arg6[%c11, %c0_47] : memref<64x128xf32, #tpu.memory_space<vmem>>, vector<1x128xf32>
    tpu.vector_store %arg6[%c11, %c0_47], %46 {strides = array<i32>} : memref<64x128xf32, #tpu.memory_space<vmem>>, vector<1x128xf32>,
    %c3_48 = arith.constant 3 : index
    %c1_49 = arith.constant 1 : index
    %48 = memref.load %arg0[%c3_48, %c1_49] : memref<4x8xi32, #tpu.memory_space<smem>>
    %49 = arith.index_cast %48 : i32 to index
    %c0_50 = arith.constant 0 : index
    %50 = vector.load %arg1[%49, %c0_50] : memref<128x128xf32, #tpu.memory_space<vmem>>, vector<1x128xf32>
    %c12 = arith.constant 12 : index
    %c0_51 = arith.constant 0 : index
    %51 = vector.load %arg6[%c12, %c0_51] : memref<64x128xf32, #tpu.memory_space<vmem>>, vector<1x128xf32>
    tpu.vector_store %arg6[%c12, %c0_51], %50 {strides = array<i32>} : memref<64x128xf32, #tpu.memory_space<vmem>>, vector<1x128xf32>,
    %c3_52 = arith.constant 3 : index
    %c1_53 = arith.constant 1 : index
    %52 = memref.load %arg0[%c3_52, %c1_53] : memref<4x8xi32, #tpu.memory_space<smem>>
    %53 = arith.index_cast %52 : i32 to index
    %c0_54 = arith.constant 0 : index
    %54 = vector.load %arg1[%53, %c0_54] : memref<128x128xf32, #tpu.memory_space<vmem>>, vector<1x128xf32>
    %c13 = arith.constant 13 : index
    %c0_55 = arith.constant 0 : index
    %55 = vector.load %arg6[%c13, %c0_55] : memref<64x128xf32, #tpu.memory_space<vmem>>, vector<1x128xf32>
    tpu.vector_store %arg6[%c13, %c0_55], %54 {strides = array<i32>} : memref<64x128xf32, #tpu.memory_space<vmem>>, vector<1x128xf32>,
    %c3_56 = arith.constant 3 : index
    %c1_57 = arith.constant 1 : index
    %56 = memref.load %arg0[%c3_56, %c1_57] : memref<4x8xi32, #tpu.memory_space<smem>>
    %57 = arith.index_cast %56 : i32 to index
    %c0_58 = arith.constant 0 : index
    %58 = vector.load %arg1[%57, %c0_58] : memref<128x128xf32, #tpu.memory_space<vmem>>, vector<1x128xf32>
    %c14 = arith.constant 14 : index
    %c0_59 = arith.constant 0 : index
    %59 = vector.load %arg6[%c14, %c0_59] : memref<64x128xf32, #tpu.memory_space<vmem>>, vector<1x128xf32>
    tpu.vector_store %arg6[%c14, %c0_59], %58 {strides = array<i32>} : memref<64x128xf32, #tpu.memory_space<vmem>>, vector<1x128xf32>,
    %c3_60 = arith.constant 3 : index
    %c1_61 = arith.constant 1 : index
    %60 = memref.load %arg0[%c3_60, %c1_61] : memref<4x8xi32, #tpu.memory_space<smem>>
    %61 = arith.index_cast %60 : i32 to index
    %c0_62 = arith.constant 0 : index
    %62 = vector.load %arg1[%61, %c0_62] : memref<128x128xf32, #tpu.memory_space<vmem>>, vector<1x128xf32>
    %c15 = arith.constant 15 : index
    %c0_63 = arith.constant 0 : index
    %63 = vector.load %arg6[%c15, %c0_63] : memref<64x128xf32, #tpu.memory_space<vmem>>, vector<1x128xf32>
    tpu.vector_store %arg6[%c15, %c0_63], %62 {strides = array<i32>} : memref<64x128xf32, #tpu.memory_space<vmem>>, vector<1x128xf32>,
    %c0_64 = arith.constant 0 : index
    %c2_65 = arith.constant 2 : index
    %64 = memref.load %arg0[%c0_64, %c2_65] : memref<4x8xi32, #tpu.memory_space<smem>>
    %65 = arith.index_cast %64 : i32 to index
    %c0_66 = arith.constant 0 : index
    %66 = vector.load %arg1[%65, %c0_66] : memref<128x128xf32, #tpu.memory_space<vmem>>, vector<1x128xf32>
    %c16 = arith.constant 16 : index
    %c0_67 = arith.constant 0 : index
    %67 = vector.load %arg6[%c16, %c0_67] : memref<64x128xf32, #tpu.memory_space<vmem>>, vector<1x128xf32>
    tpu.vector_store %arg6[%c16, %c0_67], %66 {strides = array<i32>} : memref<64x128xf32, #tpu.memory_space<vmem>>, vector<1x128xf32>,
    %c1_68 = arith.constant 1 : index
    %c2_69 = arith.constant 2 : index
    %68 = memref.load %arg0[%c1_68, %c2_69] : memref<4x8xi32, #tpu.memory_space<smem>>
    %69 = arith.index_cast %68 : i32 to index
    %c0_70 = arith.constant 0 : index
    %70 = vector.load %arg1[%69, %c0_70] : memref<128x128xf32, #tpu.memory_space<vmem>>, vector<1x128xf32>
    %c17 = arith.constant 17 : index
    %c0_71 = arith.constant 0 : index
    %71 = vector.load %arg6[%c17, %c0_71] : memref<64x128xf32, #tpu.memory_space<vmem>>, vector<1x128xf32>
    tpu.vector_store %arg6[%c17, %c0_71], %70 {strides = array<i32>} : memref<64x128xf32, #tpu.memory_space<vmem>>, vector<1x128xf32>,
    %c2_72 = arith.constant 2 : index
    %c2_73 = arith.constant 2 : index
    %72 = memref.load %arg0[%c2_72, %c2_73] : memref<4x8xi32, #tpu.memory_space<smem>>
    %73 = arith.index_cast %72 : i32 to index
    %c0_74 = arith.constant 0 : index
    %74 = vector.load %arg1[%73, %c0_74] : memref<128x128xf32, #tpu.memory_space<vmem>>, vector<1x128xf32>
    %c18 = arith.constant 18 : index
    %c0_75 = arith.constant 0 : index
    %75 = vector.load %arg6[%c18, %c0_75] : memref<64x128xf32, #tpu.memory_space<vmem>>, vector<1x128xf32>
    tpu.vector_store %arg6[%c18, %c0_75], %74 {strides = array<i32>} : memref<64x128xf32, #tpu.memory_space<vmem>>, vector<1x128xf32>,
    %c3_76 = arith.constant 3 : index
    %c2_77 = arith.constant 2 : index
    %76 = memref.load %arg0[%c3_76, %c2_77] : memref<4x8xi32, #tpu.memory_space<smem>>
    %77 = arith.index_cast %76 : i32 to index
    %c0_78 = arith.constant 0 : index
    %78 = vector.load %arg1[%77, %c0_78] : memref<128x128xf32, #tpu.memory_space<vmem>>, vector<1x128xf32>
    %c19 = arith.constant 19 : index
    %c0_79 = arith.constant 0 : index
    %79 = vector.load %arg6[%c19, %c0_79] : memref<64x128xf32, #tpu.memory_space<vmem>>, vector<1x128xf32>
    tpu.vector_store %arg6[%c19, %c0_79], %78 {strides = array<i32>} : memref<64x128xf32, #tpu.memory_space<vmem>>, vector<1x128xf32>,
    %c3_80 = arith.constant 3 : index
    %c2_81 = arith.constant 2 : index
    %80 = memref.load %arg0[%c3_80, %c2_81] : memref<4x8xi32, #tpu.memory_space<smem>>
    %81 = arith.index_cast %80 : i32 to index
    %c0_82 = arith.constant 0 : index
    %82 = vector.load %arg1[%81, %c0_82] : memref<128x128xf32, #tpu.memory_space<vmem>>, vector<1x128xf32>
    %c20 = arith.constant 20 : index
    %c0_83 = arith.constant 0 : index
    %83 = vector.load %arg6[%c20, %c0_83] : memref<64x128xf32, #tpu.memory_space<vmem>>, vector<1x128xf32>
    tpu.vector_store %arg6[%c20, %c0_83], %82 {strides = array<i32>} : memref<64x128xf32, #tpu.memory_space<vmem>>, vector<1x128xf32>,
    %c3_84 = arith.constant 3 : index
    %c2_85 = arith.constant 2 : index
    %84 = memref.load %arg0[%c3_84, %c2_85] : memref<4x8xi32, #tpu.memory_space<smem>>
    %85 = arith.index_cast %84 : i32 to index
    %c0_86 = arith.constant 0 : index
    %86 = vector.load %arg1[%85, %c0_86] : memref<128x128xf32, #tpu.memory_space<vmem>>, vector<1x128xf32>
    %c21 = arith.constant 21 : index
    %c0_87 = arith.constant 0 : index
    %87 = vector.load %arg6[%c21, %c0_87] : memref<64x128xf32, #tpu.memory_space<vmem>>, vector<1x128xf32>
    tpu.vector_store %arg6[%c21, %c0_87], %86 {strides = array<i32>} : memref<64x128xf32, #tpu.memory_space<vmem>>, vector<1x128xf32>,
    %c3_88 = arith.constant 3 : index
    %c2_89 = arith.constant 2 : index
    %88 = memref.load %arg0[%c3_88, %c2_89] : memref<4x8xi32, #tpu.memory_space<smem>>
    %89 = arith.index_cast %88 : i32 to index
    %c0_90 = arith.constant 0 : index
    %90 = vector.load %arg1[%89, %c0_90] : memref<128x128xf32, #tpu.memory_space<vmem>>, vector<1x128xf32>
    %c22 = arith.constant 22 : index
    %c0_91 = arith.constant 0 : index
    %91 = vector.load %arg6[%c22, %c0_91] : memref<64x128xf32, #tpu.memory_space<vmem>>, vector<1x128xf32>
    tpu.vector_store %arg6[%c22, %c0_91], %90 {strides = array<i32>} : memref<64x128xf32, #tpu.memory_space<vmem>>, vector<1x128xf32>,
    %c3_92 = arith.constant 3 : index
    %c2_93 = arith.constant 2 : index
    %92 = memref.load %arg0[%c3_92, %c2_93] : memref<4x8xi32, #tpu.memory_space<smem>>
    %93 = arith.index_cast %92 : i32 to index
    %c0_94 = arith.constant 0 : index
    %94 = vector.load %arg1[%93, %c0_94] : memref<128x128xf32, #tpu.memory_space<vmem>>, vector<1x128xf32>
    %c23 = arith.constant 23 : index
    %c0_95 = arith.constant 0 : index
    %95 = vector.load %arg6[%c23, %c0_95] : memref<64x128xf32, #tpu.memory_space<vmem>>, vector<1x128xf32>
    tpu.vector_store %arg6[%c23, %c0_95], %94 {strides = array<i32>} : memref<64x128xf32, #tpu.memory_space<vmem>>, vector<1x128xf32>,
    %c0_96 = arith.constant 0 : index
    %c3_97 = arith.constant 3 : index
    %96 = memref.load %arg0[%c0_96, %c3_97] : memref<4x8xi32, #tpu.memory_space<smem>>
    %97 = arith.index_cast %96 : i32 to index
    %c0_98 = arith.constant 0 : index
    %98 = vector.load %arg1[%97, %c0_98] : memref<128x128xf32, #tpu.memory_space<vmem>>, vector<1x128xf32>
    %c24 = arith.constant 24 : index
    %c0_99 = arith.constant 0 : index
    %99 = vector.load %arg6[%c24, %c0_99] : memref<64x128xf32, #tpu.memory_space<vmem>>, vector<1x128xf32>
    tpu.vector_store %arg6[%c24, %c0_99], %98 {strides = array<i32>} : memref<64x128xf32, #tpu.memory_space<vmem>>, vector<1x128xf32>,
    %c1_100 = arith.constant 1 : index
    %c3_101 = arith.constant 3 : index
    %100 = memref.load %arg0[%c1_100, %c3_101] : memref<4x8xi32, #tpu.memory_space<smem>>
    %101 = arith.index_cast %100 : i32 to index
    %c0_102 = arith.constant 0 : index
    %102 = vector.load %arg1[%101, %c0_102] : memref<128x128xf32, #tpu.memory_space<vmem>>, vector<1x128xf32>
    %c25 = arith.constant 25 : index
    %c0_103 = arith.constant 0 : index
    %103 = vector.load %arg6[%c25, %c0_103] : memref<64x128xf32, #tpu.memory_space<vmem>>, vector<1x128xf32>
    tpu.vector_store %arg6[%c25, %c0_103], %102 {strides = array<i32>} : memref<64x128xf32, #tpu.memory_space<vmem>>, vector<1x128xf32>,
    %c2_104 = arith.constant 2 : index
    %c3_105 = arith.constant 3 : index
    %104 = memref.load %arg0[%c2_104, %c3_105] : memref<4x8xi32, #tpu.memory_space<smem>>
    %105 = arith.index_cast %104 : i32 to index
    %c0_106 = arith.constant 0 : index
    %106 = vector.load %arg1[%105, %c0_106] : memref<128x128xf32, #tpu.memory_space<vmem>>, vector<1x128xf32>
    %c26 = arith.constant 26 : index
    %c0_107 = arith.constant 0 : index
    %107 = vector.load %arg6[%c26, %c0_107] : memref<64x128xf32, #tpu.memory_space<vmem>>, vector<1x128xf32>
    tpu.vector_store %arg6[%c26, %c0_107], %106 {strides = array<i32>} : memref<64x128xf32, #tpu.memory_space<vmem>>, vector<1x128xf32>,
    %c3_108 = arith.constant 3 : index
    %c3_109 = arith.constant 3 : index
    %108 = memref.load %arg0[%c3_108, %c3_109] : memref<4x8xi32, #tpu.memory_space<smem>>
    %109 = arith.index_cast %108 : i32 to index
    %c0_110 = arith.constant 0 : index
    %110 = vector.load %arg1[%109, %c0_110] : memref<128x128xf32, #tpu.memory_space<vmem>>, vector<1x128xf32>
    %c27 = arith.constant 27 : index
    %c0_111 = arith.constant 0 : index
    %111 = vector.load %arg6[%c27, %c0_111] : memref<64x128xf32, #tpu.memory_space<vmem>>, vector<1x128xf32>
    tpu.vector_store %arg6[%c27, %c0_111], %110 {strides = array<i32>} : memref<64x128xf32, #tpu.memory_space<vmem>>, vector<1x128xf32>,
    %c3_112 = arith.constant 3 : index
    %c3_113 = arith.constant 3 : index
    %112 = memref.load %arg0[%c3_112, %c3_113] : memref<4x8xi32, #tpu.memory_space<smem>>
    %113 = arith.index_cast %112 : i32 to index
    %c0_114 = arith.constant 0 : index
    %114 = vector.load %arg1[%113, %c0_114] : memref<128x128xf32, #tpu.memory_space<vmem>>, vector<1x128xf32>
    %c28 = arith.constant 28 : index
    %c0_115 = arith.constant 0 : index
    %115 = vector.load %arg6[%c28, %c0_115] : memref<64x128xf32, #tpu.memory_space<vmem>>, vector<1x128xf32>
    tpu.vector_store %arg6[%c28, %c0_115], %114 {strides = array<i32>} : memref<64x128xf32, #tpu.memory_space<vmem>>, vector<1x128xf32>,
    %c3_116 = arith.constant 3 : index
    %c3_117 = arith.constant 3 : index
    %116 = memref.load %arg0[%c3_116, %c3_117] : memref<4x8xi32, #tpu.memory_space<smem>>
    %117 = arith.index_cast %116 : i32 to index
    %c0_118 = arith.constant 0 : index
    %118 = vector.load %arg1[%117, %c0_118] : memref<128x128xf32, #tpu.memory_space<vmem>>, vector<1x128xf32>
    %c29 = arith.constant 29 : index
    %c0_119 = arith.constant 0 : index
    %119 = vector.load %arg6[%c29, %c0_119] : memref<64x128xf32, #tpu.memory_space<vmem>>, vector<1x128xf32>
    tpu.vector_store %arg6[%c29, %c0_119], %118 {strides = array<i32>} : memref<64x128xf32, #tpu.memory_space<vmem>>, vector<1x128xf32>,
    %c3_120 = arith.constant 3 : index
    %c3_121 = arith.constant 3 : index
    %120 = memref.load %arg0[%c3_120, %c3_121] : memref<4x8xi32, #tpu.memory_space<smem>>
    %121 = arith.index_cast %120 : i32 to index
    %c0_122 = arith.constant 0 : index
    %122 = vector.load %arg1[%121, %c0_122] : memref<128x128xf32, #tpu.memory_space<vmem>>, vector<1x128xf32>
    %c30 = arith.constant 30 : index
    %c0_123 = arith.constant 0 : index
    %123 = vector.load %arg6[%c30, %c0_123] : memref<64x128xf32, #tpu.memory_space<vmem>>, vector<1x128xf32>
    tpu.vector_store %arg6[%c30, %c0_123], %122 {strides = array<i32>} : memref<64x128xf32, #tpu.memory_space<vmem>>, vector<1x128xf32>,
    %c3_124 = arith.constant 3 : index
    %c3_125 = arith.constant 3 : index
    %124 = memref.load %arg0[%c3_124, %c3_125] : memref<4x8xi32, #tpu.memory_space<smem>>
    %125 = arith.index_cast %124 : i32 to index
    %c0_126 = arith.constant 0 : index
    %126 = vector.load %arg1[%125, %c0_126] : memref<128x128xf32, #tpu.memory_space<vmem>>, vector<1x128xf32>
    %c31 = arith.constant 31 : index
    %c0_127 = arith.constant 0 : index
    %127 = vector.load %arg6[%c31, %c0_127] : memref<64x128xf32, #tpu.memory_space<vmem>>, vector<1x128xf32>
    tpu.vector_store %arg6[%c31, %c0_127], %126 {strides = array<i32>} : memref<64x128xf32, #tpu.memory_space<vmem>>, vector<1x128xf32>,
    %c0_128 = arith.constant 0 : index
    %c4_129 = arith.constant 4 : index
    %128 = memref.load %arg0[%c0_128, %c4_129] : memref<4x8xi32, #tpu.memory_space<smem>>
    %129 = arith.index_cast %128 : i32 to index
    %c0_130 = arith.constant 0 : index
    %130 = vector.load %arg1[%129, %c0_130] : memref<128x128xf32, #tpu.memory_space<vmem>>, vector<1x128xf32>
    %c32 = arith.constant 32 : index
    %c0_131 = arith.constant 0 : index
    %131 = vector.load %arg6[%c32, %c0_131] : memref<64x128xf32, #tpu.memory_space<vmem>>, vector<1x128xf32>
    tpu.vector_store %arg6[%c32, %c0_131], %130 {strides = array<i32>} : memref<64x128xf32, #tpu.memory_space<vmem>>, vector<1x128xf32>,
    %c1_132 = arith.constant 1 : index
    %c4_133 = arith.constant 4 : index
    %132 = memref.load %arg0[%c1_132, %c4_133] : memref<4x8xi32, #tpu.memory_space<smem>>
    %133 = arith.index_cast %132 : i32 to index
    %c0_134 = arith.constant 0 : index
    %134 = vector.load %arg1[%133, %c0_134] : memref<128x128xf32, #tpu.memory_space<vmem>>, vector<1x128xf32>
    %c33 = arith.constant 33 : index
    %c0_135 = arith.constant 0 : index
    %135 = vector.load %arg6[%c33, %c0_135] : memref<64x128xf32, #tpu.memory_space<vmem>>, vector<1x128xf32>
    tpu.vector_store %arg6[%c33, %c0_135], %134 {strides = array<i32>} : memref<64x128xf32, #tpu.memory_space<vmem>>, vector<1x128xf32>,
    %c2_136 = arith.constant 2 : index
    %c4_137 = arith.constant 4 : index
    %136 = memref.load %arg0[%c2_136, %c4_137] : memref<4x8xi32, #tpu.memory_space<smem>>
    %137 = arith.index_cast %136 : i32 to index
    %c0_138 = arith.constant 0 : index
    %138 = vector.load %arg1[%137, %c0_138] : memref<128x128xf32, #tpu.memory_space<vmem>>, vector<1x128xf32>
    %c34 = arith.constant 34 : index
    %c0_139 = arith.constant 0 : index
    %139 = vector.load %arg6[%c34, %c0_139] : memref<64x128xf32, #tpu.memory_space<vmem>>, vector<1x128xf32>
    tpu.vector_store %arg6[%c34, %c0_139], %138 {strides = array<i32>} : memref<64x128xf32, #tpu.memory_space<vmem>>, vector<1x128xf32>,
    %c3_140 = arith.constant 3 : index
    %c4_141 = arith.constant 4 : index
    %140 = memref.load %arg0[%c3_140, %c4_141] : memref<4x8xi32, #tpu.memory_space<smem>>
    %141 = arith.index_cast %140 : i32 to index
    %c0_142 = arith.constant 0 : index
    %142 = vector.load %arg1[%141, %c0_142] : memref<128x128xf32, #tpu.memory_space<vmem>>, vector<1x128xf32>
    %c35 = arith.constant 35 : index
    %c0_143 = arith.constant 0 : index
    %143 = vector.load %arg6[%c35, %c0_143] : memref<64x128xf32, #tpu.memory_space<vmem>>, vector<1x128xf32>
    tpu.vector_store %arg6[%c35, %c0_143], %142 {strides = array<i32>} : memref<64x128xf32, #tpu.memory_space<vmem>>, vector<1x128xf32>,
    %c3_144 = arith.constant 3 : index
    %c4_145 = arith.constant 4 : index
    %144 = memref.load %arg0[%c3_144, %c4_145] : memref<4x8xi32, #tpu.memory_space<smem>>
    %145 = arith.index_cast %144 : i32 to index
    %c0_146 = arith.constant 0 : index
    %146 = vector.load %arg1[%145, %c0_146] : memref<128x128xf32, #tpu.memory_space<vmem>>, vector<1x128xf32>
    %c36 = arith.constant 36 : index
    %c0_147 = arith.constant 0 : index
    %147 = vector.load %arg6[%c36, %c0_147] : memref<64x128xf32, #tpu.memory_space<vmem>>, vector<1x128xf32>
    tpu.vector_store %arg6[%c36, %c0_147], %146 {strides = array<i32>} : memref<64x128xf32, #tpu.memory_space<vmem>>, vector<1x128xf32>,
    %c3_148 = arith.constant 3 : index
    %c4_149 = arith.constant 4 : index
    %148 = memref.load %arg0[%c3_148, %c4_149] : memref<4x8xi32, #tpu.memory_space<smem>>
    %149 = arith.index_cast %148 : i32 to index
    %c0_150 = arith.constant 0 : index
    %150 = vector.load %arg1[%149, %c0_150] : memref<128x128xf32, #tpu.memory_space<vmem>>, vector<1x128xf32>
    %c37 = arith.constant 37 : index
    %c0_151 = arith.constant 0 : index
    %151 = vector.load %arg6[%c37, %c0_151] : memref<64x128xf32, #tpu.memory_space<vmem>>, vector<1x128xf32>
    tpu.vector_store %arg6[%c37, %c0_151], %150 {strides = array<i32>} : memref<64x128xf32, #tpu.memory_space<vmem>>, vector<1x128xf32>,
    %c3_152 = arith.constant 3 : index
    %c4_153 = arith.constant 4 : index
    %152 = memref.load %arg0[%c3_152, %c4_153] : memref<4x8xi32, #tpu.memory_space<smem>>
    %153 = arith.index_cast %152 : i32 to index
    %c0_154 = arith.constant 0 : index
    %154 = vector.load %arg1[%153, %c0_154] : memref<128x128xf32, #tpu.memory_space<vmem>>, vector<1x128xf32>
    %c38 = arith.constant 38 : index
    %c0_155 = arith.constant 0 : index
    %155 = vector.load %arg6[%c38, %c0_155] : memref<64x128xf32, #tpu.memory_space<vmem>>, vector<1x128xf32>
    tpu.vector_store %arg6[%c38, %c0_155], %154 {strides = array<i32>} : memref<64x128xf32, #tpu.memory_space<vmem>>, vector<1x128xf32>,
    %c3_156 = arith.constant 3 : index
    %c4_157 = arith.constant 4 : index
    %156 = memref.load %arg0[%c3_156, %c4_157] : memref<4x8xi32, #tpu.memory_space<smem>>
    %157 = arith.index_cast %156 : i32 to index
    %c0_158 = arith.constant 0 : index
    %158 = vector.load %arg1[%157, %c0_158] : memref<128x128xf32, #tpu.memory_space<vmem>>, vector<1x128xf32>
    %c39 = arith.constant 39 : index
    %c0_159 = arith.constant 0 : index
    %159 = vector.load %arg6[%c39, %c0_159] : memref<64x128xf32, #tpu.memory_space<vmem>>, vector<1x128xf32>
    tpu.vector_store %arg6[%c39, %c0_159], %158 {strides = array<i32>} : memref<64x128xf32, #tpu.memory_space<vmem>>, vector<1x128xf32>,
    %c0_160 = arith.constant 0 : index
    %c5_161 = arith.constant 5 : index
    %160 = memref.load %arg0[%c0_160, %c5_161] : memref<4x8xi32, #tpu.memory_space<smem>>
    %161 = arith.index_cast %160 : i32 to index
    %c0_162 = arith.constant 0 : index
    %162 = vector.load %arg1[%161, %c0_162] : memref<128x128xf32, #tpu.memory_space<vmem>>, vector<1x128xf32>
    %c40 = arith.constant 40 : index
    %c0_163 = arith.constant 0 : index
    %163 = vector.load %arg6[%c40, %c0_163] : memref<64x128xf32, #tpu.memory_space<vmem>>, vector<1x128xf32>
    tpu.vector_store %arg6[%c40, %c0_163], %162 {strides = array<i32>} : memref<64x128xf32, #tpu.memory_space<vmem>>, vector<1x128xf32>,
    %c1_164 = arith.constant 1 : index
    %c5_165 = arith.constant 5 : index
    %164 = memref.load %arg0[%c1_164, %c5_165] : memref<4x8xi32, #tpu.memory_space<smem>>
    %165 = arith.index_cast %164 : i32 to index
    %c0_166 = arith.constant 0 : index
    %166 = vector.load %arg1[%165, %c0_166] : memref<128x128xf32, #tpu.memory_space<vmem>>, vector<1x128xf32>
    %c41 = arith.constant 41 : index
    %c0_167 = arith.constant 0 : index
    %167 = vector.load %arg6[%c41, %c0_167] : memref<64x128xf32, #tpu.memory_space<vmem>>, vector<1x128xf32>
    tpu.vector_store %arg6[%c41, %c0_167], %166 {strides = array<i32>} : memref<64x128xf32, #tpu.memory_space<vmem>>, vector<1x128xf32>,
    %c2_168 = arith.constant 2 : index
    %c5_169 = arith.constant 5 : index
    %168 = memref.load %arg0[%c2_168, %c5_169] : memref<4x8xi32, #tpu.memory_space<smem>>
    %169 = arith.index_cast %168 : i32 to index
    %c0_170 = arith.constant 0 : index
    %170 = vector.load %arg1[%169, %c0_170] : memref<128x128xf32, #tpu.memory_space<vmem>>, vector<1x128xf32>
    %c42 = arith.constant 42 : index
    %c0_171 = arith.constant 0 : index
    %171 = vector.load %arg6[%c42, %c0_171] : memref<64x128xf32, #tpu.memory_space<vmem>>, vector<1x128xf32>
    tpu.vector_store %arg6[%c42, %c0_171], %170 {strides = array<i32>} : memref<64x128xf32, #tpu.memory_space<vmem>>, vector<1x128xf32>,
    %c3_172 = arith.constant 3 : index
    %c5_173 = arith.constant 5 : index
    %172 = memref.load %arg0[%c3_172, %c5_173] : memref<4x8xi32, #tpu.memory_space<smem>>
    %173 = arith.index_cast %172 : i32 to index
    %c0_174 = arith.constant 0 : index
    %174 = vector.load %arg1[%173, %c0_174] : memref<128x128xf32, #tpu.memory_space<vmem>>, vector<1x128xf32>
    %c43 = arith.constant 43 : index
    %c0_175 = arith.constant 0 : index
    %175 = vector.load %arg6[%c43, %c0_175] : memref<64x128xf32, #tpu.memory_space<vmem>>, vector<1x128xf32>
    tpu.vector_store %arg6[%c43, %c0_175], %174 {strides = array<i32>} : memref<64x128xf32, #tpu.memory_space<vmem>>, vector<1x128xf32>,
    %c3_176 = arith.constant 3 : index
    %c5_177 = arith.constant 5 : index
    %176 = memref.load %arg0[%c3_176, %c5_177] : memref<4x8xi32, #tpu.memory_space<smem>>
    %177 = arith.index_cast %176 : i32 to index
    %c0_178 = arith.constant 0 : index
    %178 = vector.load %arg1[%177, %c0_178] : memref<128x128xf32, #tpu.memory_space<vmem>>, vector<1x128xf32>
    %c44 = arith.constant 44 : index
    %c0_179 = arith.constant 0 : index
    %179 = vector.load %arg6[%c44, %c0_179] : memref<64x128xf32, #tpu.memory_space<vmem>>, vector<1x128xf32>
    tpu.vector_store %arg6[%c44, %c0_179], %178 {strides = array<i32>} : memref<64x128xf32, #tpu.memory_space<vmem>>, vector<1x128xf32>,
    %c3_180 = arith.constant 3 : index
    %c5_181 = arith.constant 5 : index
    %180 = memref.load %arg0[%c3_180, %c5_181] : memref<4x8xi32, #tpu.memory_space<smem>>
    %181 = arith.index_cast %180 : i32 to index
    %c0_182 = arith.constant 0 : index
    %182 = vector.load %arg1[%181, %c0_182] : memref<128x128xf32, #tpu.memory_space<vmem>>, vector<1x128xf32>
    %c45 = arith.constant 45 : index
    %c0_183 = arith.constant 0 : index
    %183 = vector.load %arg6[%c45, %c0_183] : memref<64x128xf32, #tpu.memory_space<vmem>>, vector<1x128xf32>
    tpu.vector_store %arg6[%c45, %c0_183], %182 {strides = array<i32>} : memref<64x128xf32, #tpu.memory_space<vmem>>, vector<1x128xf32>,
    %c3_184 = arith.constant 3 : index
    %c5_185 = arith.constant 5 : index
    %184 = memref.load %arg0[%c3_184, %c5_185] : memref<4x8xi32, #tpu.memory_space<smem>>
    %185 = arith.index_cast %184 : i32 to index
    %c0_186 = arith.constant 0 : index
    %186 = vector.load %arg1[%185, %c0_186] : memref<128x128xf32, #tpu.memory_space<vmem>>, vector<1x128xf32>
    %c46 = arith.constant 46 : index
    %c0_187 = arith.constant 0 : index
    %187 = vector.load %arg6[%c46, %c0_187] : memref<64x128xf32, #tpu.memory_space<vmem>>, vector<1x128xf32>
    tpu.vector_store %arg6[%c46, %c0_187], %186 {strides = array<i32>} : memref<64x128xf32, #tpu.memory_space<vmem>>, vector<1x128xf32>,
    %c3_188 = arith.constant 3 : index
    %c5_189 = arith.constant 5 : index
    %188 = memref.load %arg0[%c3_188, %c5_189] : memref<4x8xi32, #tpu.memory_space<smem>>
    %189 = arith.index_cast %188 : i32 to index
    %c0_190 = arith.constant 0 : index
    %190 = vector.load %arg1[%189, %c0_190] : memref<128x128xf32, #tpu.memory_space<vmem>>, vector<1x128xf32>
    %c47 = arith.constant 47 : index
    %c0_191 = arith.constant 0 : index
    %191 = vector.load %arg6[%c47, %c0_191] : memref<64x128xf32, #tpu.memory_space<vmem>>, vector<1x128xf32>
    tpu.vector_store %arg6[%c47, %c0_191], %190 {strides = array<i32>} : memref<64x128xf32, #tpu.memory_space<vmem>>, vector<1x128xf32>,
    %c0_192 = arith.constant 0 : index
    %c6_193 = arith.constant 6 : index
    %192 = memref.load %arg0[%c0_192, %c6_193] : memref<4x8xi32, #tpu.memory_space<smem>>
    %193 = arith.index_cast %192 : i32 to index
    %c0_194 = arith.constant 0 : index
    %194 = vector.load %arg1[%193, %c0_194] : memref<128x128xf32, #tpu.memory_space<vmem>>, vector<1x128xf32>
    %c48 = arith.constant 48 : index
    %c0_195 = arith.constant 0 : index
    %195 = vector.load %arg6[%c48, %c0_195] : memref<64x128xf32, #tpu.memory_space<vmem>>, vector<1x128xf32>
    tpu.vector_store %arg6[%c48, %c0_195], %194 {strides = array<i32>} : memref<64x128xf32, #tpu.memory_space<vmem>>, vector<1x128xf32>,
    %c1_196 = arith.constant 1 : index
    %c6_197 = arith.constant 6 : index
    %196 = memref.load %arg0[%c1_196, %c6_197] : memref<4x8xi32, #tpu.memory_space<smem>>
    %197 = arith.index_cast %196 : i32 to index
    %c0_198 = arith.constant 0 : index
    %198 = vector.load %arg1[%197, %c0_198] : memref<128x128xf32, #tpu.memory_space<vmem>>, vector<1x128xf32>
    %c49 = arith.constant 49 : index
    %c0_199 = arith.constant 0 : index
    %199 = vector.load %arg6[%c49, %c0_199] : memref<64x128xf32, #tpu.memory_space<vmem>>, vector<1x128xf32>
    tpu.vector_store %arg6[%c49, %c0_199], %198 {strides = array<i32>} : memref<64x128xf32, #tpu.memory_space<vmem>>, vector<1x128xf32>,
    %c2_200 = arith.constant 2 : index
    %c6_201 = arith.constant 6 : index
    %200 = memref.load %arg0[%c2_200, %c6_201] : memref<4x8xi32, #tpu.memory_space<smem>>
    %201 = arith.index_cast %200 : i32 to index
    %c0_202 = arith.constant 0 : index
    %202 = vector.load %arg1[%201, %c0_202] : memref<128x128xf32, #tpu.memory_space<vmem>>, vector<1x128xf32>
    %c50 = arith.constant 50 : index
    %c0_203 = arith.constant 0 : index
    %203 = vector.load %arg6[%c50, %c0_203] : memref<64x128xf32, #tpu.memory_space<vmem>>, vector<1x128xf32>
    tpu.vector_store %arg6[%c50, %c0_203], %202 {strides = array<i32>} : memref<64x128xf32, #tpu.memory_space<vmem>>, vector<1x128xf32>,
    %c3_204 = arith.constant 3 : index
    %c6_205 = arith.constant 6 : index
    %204 = memref.load %arg0[%c3_204, %c6_205] : memref<4x8xi32, #tpu.memory_space<smem>>
    %205 = arith.index_cast %204 : i32 to index
    %c0_206 = arith.constant 0 : index
    %206 = vector.load %arg1[%205, %c0_206] : memref<128x128xf32, #tpu.memory_space<vmem>>, vector<1x128xf32>
    %c51 = arith.constant 51 : index
    %c0_207 = arith.constant 0 : index
    %207 = vector.load %arg6[%c51, %c0_207] : memref<64x128xf32, #tpu.memory_space<vmem>>, vector<1x128xf32>
    tpu.vector_store %arg6[%c51, %c0_207], %206 {strides = array<i32>} : memref<64x128xf32, #tpu.memory_space<vmem>>, vector<1x128xf32>,
    %c3_208 = arith.constant 3 : index
    %c6_209 = arith.constant 6 : index
    %208 = memref.load %arg0[%c3_208, %c6_209] : memref<4x8xi32, #tpu.memory_space<smem>>
    %209 = arith.index_cast %208 : i32 to index
    %c0_210 = arith.constant 0 : index
    %210 = vector.load %arg1[%209, %c0_210] : memref<128x128xf32, #tpu.memory_space<vmem>>, vector<1x128xf32>
    %c52 = arith.constant 52 : index
    %c0_211 = arith.constant 0 : index
    %211 = vector.load %arg6[%c52, %c0_211] : memref<64x128xf32, #tpu.memory_space<vmem>>, vector<1x128xf32>
    tpu.vector_store %arg6[%c52, %c0_211], %210 {strides = array<i32>} : memref<64x128xf32, #tpu.memory_space<vmem>>, vector<1x128xf32>,
    %c3_212 = arith.constant 3 : index
    %c6_213 = arith.constant 6 : index
    %212 = memref.load %arg0[%c3_212, %c6_213] : memref<4x8xi32, #tpu.memory_space<smem>>
    %213 = arith.index_cast %212 : i32 to index
    %c0_214 = arith.constant 0 : index
    %214 = vector.load %arg1[%213, %c0_214] : memref<128x128xf32, #tpu.memory_space<vmem>>, vector<1x128xf32>
    %c53 = arith.constant 53 : index
    %c0_215 = arith.constant 0 : index
    %215 = vector.load %arg6[%c53, %c0_215] : memref<64x128xf32, #tpu.memory_space<vmem>>, vector<1x128xf32>
    tpu.vector_store %arg6[%c53, %c0_215], %214 {strides = array<i32>} : memref<64x128xf32, #tpu.memory_space<vmem>>, vector<1x128xf32>,
    %c3_216 = arith.constant 3 : index
    %c6_217 = arith.constant 6 : index
    %216 = memref.load %arg0[%c3_216, %c6_217] : memref<4x8xi32, #tpu.memory_space<smem>>
    %217 = arith.index_cast %216 : i32 to index
    %c0_218 = arith.constant 0 : index
    %218 = vector.load %arg1[%217, %c0_218] : memref<128x128xf32, #tpu.memory_space<vmem>>, vector<1x128xf32>
    %c54 = arith.constant 54 : index
    %c0_219 = arith.constant 0 : index
    %219 = vector.load %arg6[%c54, %c0_219] : memref<64x128xf32, #tpu.memory_space<vmem>>, vector<1x128xf32>
    tpu.vector_store %arg6[%c54, %c0_219], %218 {strides = array<i32>} : memref<64x128xf32, #tpu.memory_space<vmem>>, vector<1x128xf32>,
    %c3_220 = arith.constant 3 : index
    %c6_221 = arith.constant 6 : index
    %220 = memref.load %arg0[%c3_220, %c6_221] : memref<4x8xi32, #tpu.memory_space<smem>>
    %221 = arith.index_cast %220 : i32 to index
    %c0_222 = arith.constant 0 : index
    %222 = vector.load %arg1[%221, %c0_222] : memref<128x128xf32, #tpu.memory_space<vmem>>, vector<1x128xf32>
    %c55 = arith.constant 55 : index
    %c0_223 = arith.constant 0 : index
    %223 = vector.load %arg6[%c55, %c0_223] : memref<64x128xf32, #tpu.memory_space<vmem>>, vector<1x128xf32>
    tpu.vector_store %arg6[%c55, %c0_223], %222 {strides = array<i32>} : memref<64x128xf32, #tpu.memory_space<vmem>>, vector<1x128xf32>,
    %c0_224 = arith.constant 0 : index
    %c7_225 = arith.constant 7 : index
    %224 = memref.load %arg0[%c0_224, %c7_225] : memref<4x8xi32, #tpu.memory_space<smem>>
    %225 = arith.index_cast %224 : i32 to index
    %c0_226 = arith.constant 0 : index
    %226 = vector.load %arg1[%225, %c0_226] : memref<128x128xf32, #tpu.memory_space<vmem>>, vector<1x128xf32>
    %c56 = arith.constant 56 : index
    %c0_227 = arith.constant 0 : index
    %227 = vector.load %arg6[%c56, %c0_227] : memref<64x128xf32, #tpu.memory_space<vmem>>, vector<1x128xf32>
    tpu.vector_store %arg6[%c56, %c0_227], %226 {strides = array<i32>} : memref<64x128xf32, #tpu.memory_space<vmem>>, vector<1x128xf32>,
    %c1_228 = arith.constant 1 : index
    %c7_229 = arith.constant 7 : index
    %228 = memref.load %arg0[%c1_228, %c7_229] : memref<4x8xi32, #tpu.memory_space<smem>>
    %229 = arith.index_cast %228 : i32 to index
    %c0_230 = arith.constant 0 : index
    %230 = vector.load %arg1[%229, %c0_230] : memref<128x128xf32, #tpu.memory_space<vmem>>, vector<1x128xf32>
    %c57 = arith.constant 57 : index
    %c0_231 = arith.constant 0 : index
    %231 = vector.load %arg6[%c57, %c0_231] : memref<64x128xf32, #tpu.memory_space<vmem>>, vector<1x128xf32>
    tpu.vector_store %arg6[%c57, %c0_231], %230 {strides = array<i32>} : memref<64x128xf32, #tpu.memory_space<vmem>>, vector<1x128xf32>,
    %c2_232 = arith.constant 2 : index
    %c7_233 = arith.constant 7 : index
    %232 = memref.load %arg0[%c2_232, %c7_233] : memref<4x8xi32, #tpu.memory_space<smem>>
    %233 = arith.index_cast %232 : i32 to index
    %c0_234 = arith.constant 0 : index
    %234 = vector.load %arg1[%233, %c0_234] : memref<128x128xf32, #tpu.memory_space<vmem>>, vector<1x128xf32>
    %c58 = arith.constant 58 : index
    %c0_235 = arith.constant 0 : index
    %235 = vector.load %arg6[%c58, %c0_235] : memref<64x128xf32, #tpu.memory_space<vmem>>, vector<1x128xf32>
    tpu.vector_store %arg6[%c58, %c0_235], %234 {strides = array<i32>} : memref<64x128xf32, #tpu.memory_space<vmem>>, vector<1x128xf32>,
    %c3_236 = arith.constant 3 : index
    %c7_237 = arith.constant 7 : index
    %236 = memref.load %arg0[%c3_236, %c7_237] : memref<4x8xi32, #tpu.memory_space<smem>>
    %237 = arith.index_cast %236 : i32 to index
    %c0_238 = arith.constant 0 : index
    %238 = vector.load %arg1[%237, %c0_238] : memref<128x128xf32, #tpu.memory_space<vmem>>, vector<1x128xf32>
    %c59 = arith.constant 59 : index
    %c0_239 = arith.constant 0 : index
    %239 = vector.load %arg6[%c59, %c0_239] : memref<64x128xf32, #tpu.memory_space<vmem>>, vector<1x128xf32>
    tpu.vector_store %arg6[%c59, %c0_239], %238 {strides = array<i32>} : memref<64x128xf32, #tpu.memory_space<vmem>>, vector<1x128xf32>,
    %c3_240 = arith.constant 3 : index
    %c7_241 = arith.constant 7 : index
    %240 = memref.load %arg0[%c3_240, %c7_241] : memref<4x8xi32, #tpu.memory_space<smem>>
    %241 = arith.index_cast %240 : i32 to index
    %c0_242 = arith.constant 0 : index
    %242 = vector.load %arg1[%241, %c0_242] : memref<128x128xf32, #tpu.memory_space<vmem>>, vector<1x128xf32>
    %c60 = arith.constant 60 : index
    %c0_243 = arith.constant 0 : index
    %243 = vector.load %arg6[%c60, %c0_243] : memref<64x128xf32, #tpu.memory_space<vmem>>, vector<1x128xf32>
    tpu.vector_store %arg6[%c60, %c0_243], %242 {strides = array<i32>} : memref<64x128xf32, #tpu.memory_space<vmem>>, vector<1x128xf32>,
    %c3_244 = arith.constant 3 : index
    %c7_245 = arith.constant 7 : index
    %244 = memref.load %arg0[%c3_244, %c7_245] : memref<4x8xi32, #tpu.memory_space<smem>>
    %245 = arith.index_cast %244 : i32 to index
    %c0_246 = arith.constant 0 : index
    %246 = vector.load %arg1[%245, %c0_246] : memref<128x128xf32, #tpu.memory_space<vmem>>, vector<1x128xf32>
    %c61 = arith.constant 61 : index
    %c0_247 = arith.constant 0 : index
    %247 = vector.load %arg6[%c61, %c0_247] : memref<64x128xf32, #tpu.memory_space<vmem>>, vector<1x128xf32>
    tpu.vector_store %arg6[%c61, %c0_247], %246 {strides = array<i32>} : memref<64x128xf32, #tpu.memory_space<vmem>>, vector<1x128xf32>,
    %c3_248 = arith.constant 3 : index
    %c7_249 = arith.constant 7 : index
    %248 = memref.load %arg0[%c3_248, %c7_249] : memref<4x8xi32, #tpu.memory_space<smem>>
    %249 = arith.index_cast %248 : i32 to index
    %c0_250 = arith.constant 0 : index
    %250 = vector.load %arg1[%249, %c0_250] : memref<128x128xf32, #tpu.memory_space<vmem>>, vector<1x128xf32>
    %c62 = arith.constant 62 : index
    %c0_251 = arith.constant 0 : index
    %251 = vector.load %arg6[%c62, %c0_251] : memref<64x128xf32, #tpu.memory_space<vmem>>, vector<1x128xf32>
    tpu.vector_store %arg6[%c62, %c0_251], %250 {strides = array<i32>} : memref<64x128xf32, #tpu.memory_space<vmem>>, vector<1x128xf32>,
    %c3_252 = arith.constant 3 : index
    %c7_253 = arith.constant 7 : index
    %252 = memref.load %arg0[%c3_252, %c7_253] : memref<4x8xi32, #tpu.memory_space<smem>>
    %253 = arith.index_cast %252 : i32 to index
    %c0_254 = arith.constant 0 : index
    %254 = vector.load %arg1[%253, %c0_254] : memref<128x128xf32, #tpu.memory_space<vmem>>, vector<1x128xf32>
    %c63 = arith.constant 63 : index
    %c0_255 = arith.constant 0 : index
    %255 = vector.load %arg6[%c63, %c0_255] : memref<64x128xf32, #tpu.memory_space<vmem>>, vector<1x128xf32>
    tpu.vector_store %arg6[%c63, %c0_255], %254 {strides = array<i32>} : memref<64x128xf32, #tpu.memory_space<vmem>>, vector<1x128xf32>,
    %c0_256 = arith.constant 0 : index
    %c0_257 = arith.constant 0 : index
    %256 = vector.load %arg2[%c0_256, %c0_257] : memref<32x128xf32, #tpu.memory_space<vmem>>, vector<32x128xf32>
    %cst = arith.constant 0.000000e+00 : f32
    %257 = vector.broadcast %cst : f32 to vector<8x32xf32>
    %cst_258 = arith.constant 0.000000e+00 : f32
    %258 = vector.broadcast %cst_258 : f32 to vector<8x32xf32>
    %c0_259 = arith.constant 0 : index
    %c0_260 = arith.constant 0 : index
    %259 = vector.load %arg6[%c0_259, %c0_260] : memref<64x128xf32, #tpu.memory_space<vmem>>, vector<8x128xf32>
    %cst_261 = arith.constant dense<0.000000e+00> : vector<8x128xf32>
    %260 = tpu.matmul %257, %256, %cst_261 {dimension_numbers = #tpu.dot_dimension_numbers<[1], [0], [0], [1], [0, 0, 1, 1], [], []>} : vector<8x32xf32>, vector<32x128xf32>, vector<8x128xf32> -> vector<8x128xf32>
    %261 = arith.addf %259, %260 : vector<8x128xf32>
    %262 = math.tanh %261 : vector<8x128xf32>
    %cst_262 = arith.constant 5.000000e-01 : f32
    %263 = vector.broadcast %cst_262 : f32 to vector<8x128xf32>
    %264 = arith.mulf %263, %262 : vector<8x128xf32>
    %cst_263 = arith.constant 5.000000e-01 : f32
    %265 = vector.broadcast %cst_263 : f32 to vector<8x128xf32>
    %266 = arith.addf %264, %265 : vector<8x128xf32>
    %267 = vector.extract_strided_slice %266 {offsets = [0, 0], sizes = [8, 32], strides = [1, 1]} : vector<8x128xf32> to vector<8x32xf32>
    %268 = vector.extract_strided_slice %266 {offsets = [0, 32], sizes = [8, 32], strides = [1, 1]} : vector<8x128xf32> to vector<8x32xf32>
    %269 = vector.extract_strided_slice %262 {offsets = [0, 64], sizes = [8, 32], strides = [1, 1]} : vector<8x128xf32> to vector<8x32xf32>
    %270 = vector.extract_strided_slice %266 {offsets = [0, 96], sizes = [8, 32], strides = [1, 1]} : vector<8x128xf32> to vector<8x32xf32>
    %271 = arith.mulf %268, %258 : vector<8x32xf32>
    %272 = arith.mulf %267, %269 : vector<8x32xf32>
    %273 = arith.addf %271, %272 : vector<8x32xf32>
    %274 = math.tanh %273 : vector<8x32xf32>
    %275 = arith.mulf %270, %274 : vector<8x32xf32>
    %c8_264 = arith.constant 8 : index
    %c0_265 = arith.constant 0 : index
    %276 = vector.load %arg6[%c8_264, %c0_265] : memref<64x128xf32, #tpu.memory_space<vmem>>, vector<8x128xf32>
    %cst_266 = arith.constant dense<0.000000e+00> : vector<8x128xf32>
    %277 = tpu.matmul %275, %256, %cst_266 {dimension_numbers = #tpu.dot_dimension_numbers<[1], [0], [0], [1], [0, 0, 1, 1], [], []>} : vector<8x32xf32>, vector<32x128xf32>, vector<8x128xf32> -> vector<8x128xf32>
    %278 = arith.addf %276, %277 : vector<8x128xf32>
    %279 = math.tanh %278 : vector<8x128xf32>
    %cst_267 = arith.constant 5.000000e-01 : f32
    %280 = vector.broadcast %cst_267 : f32 to vector<8x128xf32>
    %281 = arith.mulf %280, %279 : vector<8x128xf32>
    %cst_268 = arith.constant 5.000000e-01 : f32
    %282 = vector.broadcast %cst_268 : f32 to vector<8x128xf32>
    %283 = arith.addf %281, %282 : vector<8x128xf32>
    %284 = vector.extract_strided_slice %283 {offsets = [0, 0], sizes = [8, 32], strides = [1, 1]} : vector<8x128xf32> to vector<8x32xf32>
    %285 = vector.extract_strided_slice %283 {offsets = [0, 32], sizes = [8, 32], strides = [1, 1]} : vector<8x128xf32> to vector<8x32xf32>
    %286 = vector.extract_strided_slice %279 {offsets = [0, 64], sizes = [8, 32], strides = [1, 1]} : vector<8x128xf32> to vector<8x32xf32>
    %287 = vector.extract_strided_slice %283 {offsets = [0, 96], sizes = [8, 32], strides = [1, 1]} : vector<8x128xf32> to vector<8x32xf32>
    %288 = arith.mulf %285, %273 : vector<8x32xf32>
    %289 = arith.mulf %284, %286 : vector<8x32xf32>
    %290 = arith.addf %288, %289 : vector<8x32xf32>
    %291 = math.tanh %290 : vector<8x32xf32>
    %292 = arith.mulf %287, %291 : vector<8x32xf32>
    %c16_269 = arith.constant 16 : index
    %c0_270 = arith.constant 0 : index
    %293 = vector.load %arg6[%c16_269, %c0_270] : memref<64x128xf32, #tpu.memory_space<vmem>>, vector<8x128xf32>
    %cst_271 = arith.constant dense<0.000000e+00> : vector<8x128xf32>
    %294 = tpu.matmul %292, %256, %cst_271 {dimension_numbers = #tpu.dot_dimension_numbers<[1], [0], [0], [1], [0, 0, 1, 1], [], []>} : vector<8x32xf32>, vector<32x128xf32>, vector<8x128xf32> -> vector<8x128xf32>
    %295 = arith.addf %293, %294 : vector<8x128xf32>
    %296 = math.tanh %295 : vector<8x128xf32>
    %cst_272 = arith.constant 5.000000e-01 : f32
    %297 = vector.broadcast %cst_272 : f32 to vector<8x128xf32>
    %298 = arith.mulf %297, %296 : vector<8x128xf32>
    %cst_273 = arith.constant 5.000000e-01 : f32
    %299 = vector.broadcast %cst_273 : f32 to vector<8x128xf32>
    %300 = arith.addf %298, %299 : vector<8x128xf32>
    %301 = vector.extract_strided_slice %300 {offsets = [0, 0], sizes = [8, 32], strides = [1, 1]} : vector<8x128xf32> to vector<8x32xf32>
    %302 = vector.extract_strided_slice %300 {offsets = [0, 32], sizes = [8, 32], strides = [1, 1]} : vector<8x128xf32> to vector<8x32xf32>
    %303 = vector.extract_strided_slice %296 {offsets = [0, 64], sizes = [8, 32], strides = [1, 1]} : vector<8x128xf32> to vector<8x32xf32>
    %304 = vector.extract_strided_slice %300 {offsets = [0, 96], sizes = [8, 32], strides = [1, 1]} : vector<8x128xf32> to vector<8x32xf32>
    %305 = arith.mulf %302, %290 : vector<8x32xf32>
    %306 = arith.mulf %301, %303 : vector<8x32xf32>
    %307 = arith.addf %305, %306 : vector<8x32xf32>
    %308 = math.tanh %307 : vector<8x32xf32>
    %309 = arith.mulf %304, %308 : vector<8x32xf32>
    %c24_274 = arith.constant 24 : index
    %c0_275 = arith.constant 0 : index
    %310 = vector.load %arg6[%c24_274, %c0_275] : memref<64x128xf32, #tpu.memory_space<vmem>>, vector<8x128xf32>
    %cst_276 = arith.constant dense<0.000000e+00> : vector<8x128xf32>
    %311 = tpu.matmul %309, %256, %cst_276 {dimension_numbers = #tpu.dot_dimension_numbers<[1], [0], [0], [1], [0, 0, 1, 1], [], []>} : vector<8x32xf32>, vector<32x128xf32>, vector<8x128xf32> -> vector<8x128xf32>
    %312 = arith.addf %310, %311 : vector<8x128xf32>
    %313 = math.tanh %312 : vector<8x128xf32>
    %cst_277 = arith.constant 5.000000e-01 : f32
    %314 = vector.broadcast %cst_277 : f32 to vector<8x128xf32>
    %315 = arith.mulf %314, %313 : vector<8x128xf32>
    %cst_278 = arith.constant 5.000000e-01 : f32
    %316 = vector.broadcast %cst_278 : f32 to vector<8x128xf32>
    %317 = arith.addf %315, %316 : vector<8x128xf32>
    %318 = vector.extract_strided_slice %317 {offsets = [0, 0], sizes = [8, 32], strides = [1, 1]} : vector<8x128xf32> to vector<8x32xf32>
    %319 = vector.extract_strided_slice %317 {offsets = [0, 32], sizes = [8, 32], strides = [1, 1]} : vector<8x128xf32> to vector<8x32xf32>
    %320 = vector.extract_strided_slice %313 {offsets = [0, 64], sizes = [8, 32], strides = [1, 1]} : vector<8x128xf32> to vector<8x32xf32>
    %321 = vector.extract_strided_slice %317 {offsets = [0, 96], sizes = [8, 32], strides = [1, 1]} : vector<8x128xf32> to vector<8x32xf32>
    %322 = arith.mulf %319, %307 : vector<8x32xf32>
    %323 = arith.mulf %318, %320 : vector<8x32xf32>
    %324 = arith.addf %322, %323 : vector<8x32xf32>
    %325 = math.tanh %324 : vector<8x32xf32>
    %326 = arith.mulf %321, %325 : vector<8x32xf32>
    %c32_279 = arith.constant 32 : index
    %c0_280 = arith.constant 0 : index
    %327 = vector.load %arg6[%c32_279, %c0_280] : memref<64x128xf32, #tpu.memory_space<vmem>>, vector<8x128xf32>
    %cst_281 = arith.constant dense<0.000000e+00> : vector<8x128xf32>
    %328 = tpu.matmul %326, %256, %cst_281 {dimension_numbers = #tpu.dot_dimension_numbers<[1], [0], [0], [1], [0, 0, 1, 1], [], []>} : vector<8x32xf32>, vector<32x128xf32>, vector<8x128xf32> -> vector<8x128xf32>
    %329 = arith.addf %327, %328 : vector<8x128xf32>
    %330 = math.tanh %329 : vector<8x128xf32>
    %cst_282 = arith.constant 5.000000e-01 : f32
    %331 = vector.broadcast %cst_282 : f32 to vector<8x128xf32>
    %332 = arith.mulf %331, %330 : vector<8x128xf32>
    %cst_283 = arith.constant 5.000000e-01 : f32
    %333 = vector.broadcast %cst_283 : f32 to vector<8x128xf32>
    %334 = arith.addf %332, %333 : vector<8x128xf32>
    %335 = vector.extract_strided_slice %334 {offsets = [0, 0], sizes = [8, 32], strides = [1, 1]} : vector<8x128xf32> to vector<8x32xf32>
    %336 = vector.extract_strided_slice %334 {offsets = [0, 32], sizes = [8, 32], strides = [1, 1]} : vector<8x128xf32> to vector<8x32xf32>
    %337 = vector.extract_strided_slice %330 {offsets = [0, 64], sizes = [8, 32], strides = [1, 1]} : vector<8x128xf32> to vector<8x32xf32>
    %338 = vector.extract_strided_slice %334 {offsets = [0, 96], sizes = [8, 32], strides = [1, 1]} : vector<8x128xf32> to vector<8x32xf32>
    %339 = arith.mulf %336, %324 : vector<8x32xf32>
    %340 = arith.mulf %335, %337 : vector<8x32xf32>
    %341 = arith.addf %339, %340 : vector<8x32xf32>
    %342 = math.tanh %341 : vector<8x32xf32>
    %343 = arith.mulf %338, %342 : vector<8x32xf32>
    %c40_284 = arith.constant 40 : index
    %c0_285 = arith.constant 0 : index
    %344 = vector.load %arg6[%c40_284, %c0_285] : memref<64x128xf32, #tpu.memory_space<vmem>>, vector<8x128xf32>
    %cst_286 = arith.constant dense<0.000000e+00> : vector<8x128xf32>
    %345 = tpu.matmul %343, %256, %cst_286 {dimension_numbers = #tpu.dot_dimension_numbers<[1], [0], [0], [1], [0, 0, 1, 1], [], []>} : vector<8x32xf32>, vector<32x128xf32>, vector<8x128xf32> -> vector<8x128xf32>
    %346 = arith.addf %344, %345 : vector<8x128xf32>
    %347 = math.tanh %346 : vector<8x128xf32>
    %cst_287 = arith.constant 5.000000e-01 : f32
    %348 = vector.broadcast %cst_287 : f32 to vector<8x128xf32>
    %349 = arith.mulf %348, %347 : vector<8x128xf32>
    %cst_288 = arith.constant 5.000000e-01 : f32
    %350 = vector.broadcast %cst_288 : f32 to vector<8x128xf32>
    %351 = arith.addf %349, %350 : vector<8x128xf32>
    %352 = vector.extract_strided_slice %351 {offsets = [0, 0], sizes = [8, 32], strides = [1, 1]} : vector<8x128xf32> to vector<8x32xf32>
    %353 = vector.extract_strided_slice %351 {offsets = [0, 32], sizes = [8, 32], strides = [1, 1]} : vector<8x128xf32> to vector<8x32xf32>
    %354 = vector.extract_strided_slice %347 {offsets = [0, 64], sizes = [8, 32], strides = [1, 1]} : vector<8x128xf32> to vector<8x32xf32>
    %355 = vector.extract_strided_slice %351 {offsets = [0, 96], sizes = [8, 32], strides = [1, 1]} : vector<8x128xf32> to vector<8x32xf32>
    %356 = arith.mulf %353, %341 : vector<8x32xf32>
    %357 = arith.mulf %352, %354 : vector<8x32xf32>
    %358 = arith.addf %356, %357 : vector<8x32xf32>
    %359 = math.tanh %358 : vector<8x32xf32>
    %360 = arith.mulf %355, %359 : vector<8x32xf32>
    %c48_289 = arith.constant 48 : index
    %c0_290 = arith.constant 0 : index
    %361 = vector.load %arg6[%c48_289, %c0_290] : memref<64x128xf32, #tpu.memory_space<vmem>>, vector<8x128xf32>
    %cst_291 = arith.constant dense<0.000000e+00> : vector<8x128xf32>
    %362 = tpu.matmul %360, %256, %cst_291 {dimension_numbers = #tpu.dot_dimension_numbers<[1], [0], [0], [1], [0, 0, 1, 1], [], []>} : vector<8x32xf32>, vector<32x128xf32>, vector<8x128xf32> -> vector<8x128xf32>
    %363 = arith.addf %361, %362 : vector<8x128xf32>
    %364 = math.tanh %363 : vector<8x128xf32>
    %cst_292 = arith.constant 5.000000e-01 : f32
    %365 = vector.broadcast %cst_292 : f32 to vector<8x128xf32>
    %366 = arith.mulf %365, %364 : vector<8x128xf32>
    %cst_293 = arith.constant 5.000000e-01 : f32
    %367 = vector.broadcast %cst_293 : f32 to vector<8x128xf32>
    %368 = arith.addf %366, %367 : vector<8x128xf32>
    %369 = vector.extract_strided_slice %368 {offsets = [0, 0], sizes = [8, 32], strides = [1, 1]} : vector<8x128xf32> to vector<8x32xf32>
    %370 = vector.extract_strided_slice %368 {offsets = [0, 32], sizes = [8, 32], strides = [1, 1]} : vector<8x128xf32> to vector<8x32xf32>
    %371 = vector.extract_strided_slice %364 {offsets = [0, 64], sizes = [8, 32], strides = [1, 1]} : vector<8x128xf32> to vector<8x32xf32>
    %372 = vector.extract_strided_slice %368 {offsets = [0, 96], sizes = [8, 32], strides = [1, 1]} : vector<8x128xf32> to vector<8x32xf32>
    %373 = arith.mulf %370, %358 : vector<8x32xf32>
    %374 = arith.mulf %369, %371 : vector<8x32xf32>
    %375 = arith.addf %373, %374 : vector<8x32xf32>
    %376 = math.tanh %375 : vector<8x32xf32>
    %377 = arith.mulf %372, %376 : vector<8x32xf32>
    %c56_294 = arith.constant 56 : index
    %c0_295 = arith.constant 0 : index
    %378 = vector.load %arg6[%c56_294, %c0_295] : memref<64x128xf32, #tpu.memory_space<vmem>>, vector<8x128xf32>
    %cst_296 = arith.constant dense<0.000000e+00> : vector<8x128xf32>
    %379 = tpu.matmul %377, %256, %cst_296 {dimension_numbers = #tpu.dot_dimension_numbers<[1], [0], [0], [1], [0, 0, 1, 1], [], []>} : vector<8x32xf32>, vector<32x128xf32>, vector<8x128xf32> -> vector<8x128xf32>
    %380 = arith.addf %378, %379 : vector<8x128xf32>
    %381 = math.tanh %380 : vector<8x128xf32>
    %cst_297 = arith.constant 5.000000e-01 : f32
    %382 = vector.broadcast %cst_297 : f32 to vector<8x128xf32>
    %383 = arith.mulf %382, %381 : vector<8x128xf32>
    %cst_298 = arith.constant 5.000000e-01 : f32
    %384 = vector.broadcast %cst_298 : f32 to vector<8x128xf32>
    %385 = arith.addf %383, %384 : vector<8x128xf32>
    %386 = vector.extract_strided_slice %385 {offsets = [0, 0], sizes = [8, 32], strides = [1, 1]} : vector<8x128xf32> to vector<8x32xf32>
    %387 = vector.extract_strided_slice %385 {offsets = [0, 32], sizes = [8, 32], strides = [1, 1]} : vector<8x128xf32> to vector<8x32xf32>
    %388 = vector.extract_strided_slice %381 {offsets = [0, 64], sizes = [8, 32], strides = [1, 1]} : vector<8x128xf32> to vector<8x32xf32>
    %389 = vector.extract_strided_slice %385 {offsets = [0, 96], sizes = [8, 32], strides = [1, 1]} : vector<8x128xf32> to vector<8x32xf32>
    %390 = arith.mulf %387, %375 : vector<8x32xf32>
    %391 = arith.mulf %386, %388 : vector<8x32xf32>
    %392 = arith.addf %390, %391 : vector<8x32xf32>
    %393 = math.tanh %392 : vector<8x32xf32>
    %394 = arith.mulf %389, %393 : vector<8x32xf32>
    %cst_299 = arith.constant 0.000000e+00 : f32
    %395 = vector.broadcast %cst_299 : f32 to vector<8x32xf32>
    %396 = arith.maximumf %394, %395 : vector<8x32xf32>
    %c0_300 = arith.constant 0 : index
    %c0_301 = arith.constant 0 : index
    %397 = vector.load %arg3[%c0_300, %c0_301] : memref<32x128xf32, #tpu.memory_space<vmem>>, vector<32x128xf32>
    %cst_302 = arith.constant dense<0.000000e+00> : vector<8x128xf32>
    %398 = tpu.matmul %396, %397, %cst_302 {dimension_numbers = #tpu.dot_dimension_numbers<[1], [0], [0], [1], [0, 0, 1, 1], [], []>} : vector<8x32xf32>, vector<32x128xf32>, vector<8x128xf32> -> vector<8x128xf32>
    %c0_303 = arith.constant 0 : index
    %c0_304 = arith.constant 0 : index
    %399 = vector.load %arg4[%c0_303, %c0_304] : memref<1x128xf32, #tpu.memory_space<vmem>>, vector<1x128xf32>
    %400 = vector.broadcast %399 : vector<1x128xf32> to vector<8x128xf32>
    %401 = arith.addf %398, %400 : vector<8x128xf32>
    %c0_305 = arith.constant 0 : index
    %c0_306 = arith.constant 0 : index
    %402 = vector.load %arg5[%c0_305, %c0_306] : memref<8x128xf32, #tpu.memory_space<vmem>>, vector<8x128xf32>
    tpu.vector_store %arg5[%c0_305, %c0_306], %401 {strides = array<i32>} : memref<8x128xf32, #tpu.memory_space<vmem>>, vector<8x128xf32>,
    return
  }
}

</mosaic_0001>

<llo_original>
// kernel: tpu_custom_call.1
$region0: #{tpu_custom_call.1}
  #allocation0 [shape = 'u32[]', space=smem, size = 0x4, offset = 0x4, fixed_abs, tag = 'smem constant byte address 0x4 - core index']
  #allocation1 [shape = 'u32[72,128]{1,0:T(1,128)}', space=vmem, size = 0x9000, scoped, tag = 'internal scratch']
  #allocation2 [shape = 'f32[64,128]{1,0:T(8,128)}', space=vmem, size = 0x8000, scoped, tag = 'scratch operand']
  %s0 = inlined_call_operand.hbm [shape: s32[4,8], index: 0, kind: input, shape index: {}]
  %s1 = inlined_call_operand.hbm [shape: f32[128,128], index: 1, kind: input, shape index: {}]
  %s2 = inlined_call_operand.hbm [shape: f32[32,128], index: 2, kind: input, shape index: {}]
  %s3 = inlined_call_operand.hbm [shape: f32[32,128], index: 3, kind: input, shape index: {}]
  %s4 = inlined_call_operand.vmem [shape: f32[1,128], index: 4, kind: input, shape index: {}]
  %s5 = inlined_call_operand.hbm [shape: f32[8,128], index: 5, kind: output, shape index: {}]
  %s6 = sld [smem:[#allocation0]]
  $region46: #{tpu_custom_call.1} parent=0
    _
  %s8 = ssub.s32 1, %s6
  %s9 = scalar_select 0, %s8, %s6
  $region1: #{tpu_custom_call.1} parent=0
    #allocation3 [shape = 'u8[2048]{0}', space=smem, size = 0x800, scoped, tag = 'input window, operand 0, single buffered']
    #allocation4 [shape = 's32[1]{0}', space=sflag, size = 0x4, scoped, tag = 'scoped memory for tpu_custom_call.1']
    #allocation5 [shape = 's32[1]{0}', space=sflag, size = 0x4, scoped, tag = 'scoped memory for tpu_custom_call.1']
    #allocation6 [shape = 's32[1]{0}', space=sflag, size = 0x4, scoped, tag = 'scoped memory for tpu_custom_call.1']
    #allocation7 [shape = 'u8[65536]{0}', space=vmem, size = 0x10000, scoped, tag = 'input window, operand 1, single buffered']
    #allocation8 [shape = 'u8[16384]{0}', space=vmem, size = 0x4000, scoped, tag = 'input window, operand 2, single buffered']
    #allocation9 [shape = 's32[1]{0}', space=sflag, size = 0x4, scoped, tag = 'scoped memory for tpu_custom_call.1']
    #allocation10 [shape = 'u8[16384]{0}', space=vmem, size = 0x4000, scoped, tag = 'input window, operand 3, single buffered']
    #allocation11 [shape = 'u8[4096]{0}', space=vmem, size = 0x1000, scoped, tag = 'output window, operand 0, single buffered']
    %10 = vsyncpa [#allocation6], 0
    %11 = vsyncpa [#allocation4], 0
    %12 = vsyncpa [#allocation9], 0
    %13 = vsyncpa [#allocation5], 0
    // Predicated region
    $region2: #{tpu_custom_call.1} parent=1 // pred_check
      _
    $region3: #{tpu_custom_call.1} parent=1 // pred_check_branch
      %15 = sbr.rel (0) target = $region5
    $region4: #{tpu_custom_call.1} parent=1 // pred_region
      %17 = vsyncadd [#allocation6], 0
      %s19 = sshll.u32 %s0, 4
      %s20 = int_to_ptr.hbm [resolvable:$true] %s19
      %22 = dma.hbm_to_smem %s20, 64, [#allocation3], [#allocation6]
    $region5: #{tpu_custom_call.1} parent=1 // pred_fallthru
      _
    // Predicated region
    $region6: #{tpu_custom_call.1} parent=1 // pred_check
      _
    $region7: #{tpu_custom_call.1} parent=1 // pred_check_branch
      %24 = sbr.rel (0) target = $region9
    $region8: #{tpu_custom_call.1} parent=1 // pred_region
      %26 = vsyncadd [#allocation4], 0
      %s27 = sshll.u32 %s1, 4
      %s28 = int_to_ptr.hbm [resolvable:$true] %s27
      %s29 = sshll.u32 [#allocation7], 4
      %s30 = int_to_ptr.vmem [resolvable:$true] %s29
      %35 = dma.hbm_to_vmem [thread:$0]  %s28, 2048, %s30, [#allocation4], 128, 128, 8
    $region9: #{tpu_custom_call.1} parent=1 // pred_fallthru
      _
    // Predicated region
    $region10: #{tpu_custom_call.1} parent=1 // pred_check
      _
    $region11: #{tpu_custom_call.1} parent=1 // pred_check_branch
      %37 = sbr.rel (0) target = $region13
    $region12: #{tpu_custom_call.1} parent=1 // pred_region
      %39 = vsyncadd [#allocation9], 0
      %s40 = sshll.u32 %s2, 4
      %s41 = int_to_ptr.hbm [resolvable:$true] %s40
      %s42 = sshll.u32 [#allocation8], 4
      %s43 = int_to_ptr.vmem [resolvable:$true] %s42
      %48 = dma.hbm_to_vmem [thread:$0]  %s41, 512, %s43, [#allocation9], 128, 128, 8
    $region13: #{tpu_custom_call.1} parent=1 // pred_fallthru
      _
    // Predicated region
    $region14: #{tpu_custom_call.1} parent=1 // pred_check
      _
    $region15: #{tpu_custom_call.1} parent=1 // pred_check_branch
      %50 = sbr.rel (0) target = $region17
    $region16: #{tpu_custom_call.1} parent=1 // pred_region
      %52 = vsyncadd [#allocation9], 0
      %s53 = sshll.u32 %s3, 4
      %s54 = int_to_ptr.hbm [resolvable:$true] %s53
      %s55 = sshll.u32 [#allocation10], 4
      %s56 = int_to_ptr.vmem [resolvable:$true] %s55
      %61 = dma.hbm_to_vmem [thread:$0]  %s54, 512, %s56, [#allocation9], 128, 128, 8
    $region17: #{tpu_custom_call.1} parent=1 // pred_fallthru
      _
    // Predicated region
    $region18: #{tpu_custom_call.1} parent=1 // pred_check
      _
    $region19: #{tpu_custom_call.1} parent=1 // pred_check_branch
      %63 = sbr.rel (0) target = $region21
    $region20: #{tpu_custom_call.1} parent=1 // pred_region
      _
    $region21: #{tpu_custom_call.1} parent=1 // pred_fallthru
      _
    // Predicated region
    $region22: #{tpu_custom_call.1} parent=1 // pred_check
      _
    $region23: #{tpu_custom_call.1} parent=1 // pred_check_branch
      %65 = sbr.rel (0) target = $region25
    $region24: #{tpu_custom_call.1} parent=1 // pred_region
      %67 = dma.done [#allocation6], 64
    $region25: #{tpu_custom_call.1} parent=1 // pred_fallthru
      _
    // Predicated region
    $region26: #{tpu_custom_call.1} parent=1 // pred_check
      _
    $region27: #{tpu_custom_call.1} parent=1 // pred_check_branch
      %69 = sbr.rel (0) target = $region29
    $region28: #{tpu_custom_call.1} parent=1 // pred_region
      %71 = dma.done [#allocation4], 2048
    $region29: #{tpu_custom_call.1} parent=1 // pred_fallthru
      _
    // Predicated region
    $region30: #{tpu_custom_call.1} parent=1 // pred_check
      _
    $region31: #{tpu_custom_call.1} parent=1 // pred_check_branch
      %73 = sbr.rel (0) target = $region33
    $region32: #{tpu_custom_call.1} parent=1 // pred_region
      %75 = dma.done [#allocation9], 512
    $region33: #{tpu_custom_call.1} parent=1 // pred_fallthru
      _
    // Predicated region
    $region34: #{tpu_custom_call.1} parent=1 // pred_check
      _
    $region35: #{tpu_custom_call.1} parent=1 // pred_check_branch
      %77 = sbr.rel (0) target = $region37
    $region36: #{tpu_custom_call.1} parent=1 // pred_region
      %79 = dma.done [#allocation9], 512
    $region37: #{tpu_custom_call.1} parent=1 // pred_fallthru
      _
    %80 = sfence
    %s81 = sld [smem:[#allocation3]]
    %s82 = scalar_lea.vmem [#allocation7], %s81
    %v83 = vld [vmem:[%s82] sm:$0x1]
    %84 = vst [vmem:[#allocation2] sm:$0x1] %v83
    %s85 = sld [smem:[#allocation3 + $0x80]]
    %s86 = scalar_lea.vmem [#allocation7], %s85
    %v87 = vld [vmem:[%s86] sm:$0x1]
    %88 = vst [vmem:[#allocation2 + $0x1] sm:$0x1] %v87
    %s89 = sld [smem:[#allocation3 + $0x100]]
    %s90 = scalar_lea.vmem [#allocation7], %s89
    %v91 = vld [vmem:[%s90] sm:$0x1]
    %92 = vst [vmem:[#allocation2 + $0x2] sm:$0x1] %v91
    %s93 = sld [smem:[#allocation3 + $0x180]]
    %s94 = scalar_lea.vmem [#allocation7], %s93
    %v95 = vld [vmem:[%s94] sm:$0x1]
    %96 = vst [vmem:[#allocation2 + $0x3] sm:$0x1] %v95
    %s97 = sld [smem:[#allocation3 + $0x180]]
    %s98 = scalar_lea.vmem [#allocation7], %s97
    %v99 = vld [vmem:[%s98] sm:$0x1]
    %100 = vst [vmem:[#allocation2 + $0x4] sm:$0x1] %v99
    %s101 = sld [smem:[#allocation3 + $0x180]]
    %s102 = scalar_lea.vmem [#allocation7], %s101
    %v103 = vld [vmem:[%s102] sm:$0x1]
    %104 = vst [vmem:[#allocation2 + $0x5] sm:$0x1] %v103
    %s105 = sld [smem:[#allocation3 + $0x180]]
    %s106 = scalar_lea.vmem [#allocation7], %s105
    %v107 = vld [vmem:[%s106] sm:$0x1]
    %108 = vst [vmem:[#allocation2 + $0x6] sm:$0x1] %v107
    %s109 = sld [smem:[#allocation3 + $0x180]]
    %s110 = scalar_lea.vmem [#allocation7], %s109
    %v111 = vld [vmem:[%s110] sm:$0x1]
    %112 = vst [vmem:[#allocation2 + $0x7] sm:$0x1] %v111
    %s113 = sld [smem:[#allocation3 + $0x1]]
    %s114 = scalar_lea.vmem [#allocation7], %s113
    %v115 = vld [vmem:[%s114] sm:$0x1]
    %116 = vst [vmem:[#allocation2 + $0x8] sm:$0x1] %v115
    %s117 = sld [smem:[#allocation3 + $0x81]]
    %s118 = scalar_lea.vmem [#allocation7], %s117
    %v119 = vld [vmem:[%s118] sm:$0x1]
    %120 = vst [vmem:[#allocation2 + $0x9] sm:$0x1] %v119
    %s121 = sld [smem:[#allocation3 + $0x101]]
    %s122 = scalar_lea.vmem [#allocation7], %s121
    %v123 = vld [vmem:[%s122] sm:$0x1]
    %124 = vst [vmem:[#allocation2 + $0xa] sm:$0x1] %v123
    %s125 = sld [smem:[#allocation3 + $0x181]]
    %s126 = scalar_lea.vmem [#allocation7], %s125
    %v127 = vld [vmem:[%s126] sm:$0x1]
    %128 = vst [vmem:[#allocation2 + $0xb] sm:$0x1] %v127
    %s129 = sld [smem:[#allocation3 + $0x181]]
    %s130 = scalar_lea.vmem [#allocation7], %s129
    %v131 = vld [vmem:[%s130] sm:$0x1]
    %132 = vst [vmem:[#allocation2 + $0xc] sm:$0x1] %v131
    %s133 = sld [smem:[#allocation3 + $0x181]]
    %s134 = scalar_lea.vmem [#allocation7], %s133
    %v135 = vld [vmem:[%s134] sm:$0x1]
    %136 = vst [vmem:[#allocation2 + $0xd] sm:$0x1] %v135
    %s137 = sld [smem:[#allocation3 + $0x181]]
    %s138 = scalar_lea.vmem [#allocation7], %s137
    %v139 = vld [vmem:[%s138] sm:$0x1]
    %140 = vst [vmem:[#allocation2 + $0xe] sm:$0x1] %v139
    %s141 = sld [smem:[#allocation3 + $0x181]]
    %s142 = scalar_lea.vmem [#allocation7], %s141
    %v143 = vld [vmem:[%s142] sm:$0x1]
    %144 = vst [vmem:[#allocation2 + $0xf] sm:$0x1] %v143
    %s145 = sld [smem:[#allocation3 + $0x2]]
    %s146 = scalar_lea.vmem [#allocation7], %s145
    %v147 = vld [vmem:[%s146] sm:$0x1]
    %148 = vst [vmem:[#allocation2 + $0x10] sm:$0x1] %v147
    %s149 = sld [smem:[#allocation3 + $0x82]]
    %s150 = scalar_lea.vmem [#allocation7], %s149
    %v151 = vld [vmem:[%s150] sm:$0x1]
    %152 = vst [vmem:[#allocation2 + $0x11] sm:$0x1] %v151
    %s153 = sld [smem:[#allocation3 + $0x102]]
    %s154 = scalar_lea.vmem [#allocation7], %s153
    %v155 = vld [vmem:[%s154] sm:$0x1]
    %156 = vst [vmem:[#allocation2 + $0x12] sm:$0x1] %v155
    %s157 = sld [smem:[#allocation3 + $0x182]]
    %s158 = scalar_lea.vmem [#allocation7], %s157
    %v159 = vld [vmem:[%s158] sm:$0x1]
    %160 = vst [vmem:[#allocation2 + $0x13] sm:$0x1] %v159
    %s161 = sld [smem:[#allocation3 + $0x182]]
    %s162 = scalar_lea.vmem [#allocation7], %s161
    %v163 = vld [vmem:[%s162] sm:$0x1]
    %164 = vst [vmem:[#allocation2 + $0x14] sm:$0x1] %v163
    %s165 = sld [smem:[#allocation3 + $0x182]]
    %s166 = scalar_lea.vmem [#allocation7], %s165
    %v167 = vld [vmem:[%s166] sm:$0x1]
    %168 = vst [vmem:[#allocation2 + $0x15] sm:$0x1] %v167
    %s169 = sld [smem:[#allocation3 + $0x182]]
    %s170 = scalar_lea.vmem [#allocation7], %s169
    %v171 = vld [vmem:[%s170] sm:$0x1]
    %172 = vst [vmem:[#allocation2 + $0x16] sm:$0x1] %v171
    %s173 = sld [smem:[#allocation3 + $0x182]]
    %s174 = scalar_lea.vmem [#allocation7], %s173
    %v175 = vld [vmem:[%s174] sm:$0x1]
    %176 = vst [vmem:[#allocation2 + $0x17] sm:$0x1] %v175
    %s177 = sld [smem:[#allocation3 + $0x3]]
    %s178 = scalar_lea.vmem [#allocation7], %s177
    %v179 = vld [vmem:[%s178] sm:$0x1]
    %180 = vst [vmem:[#allocation2 + $0x18] sm:$0x1] %v179
    %s181 = sld [smem:[#allocation3 + $0x83]]
    %s182 = scalar_lea.vmem [#allocation7], %s181
    %v183 = vld [vmem:[%s182] sm:$0x1]
    %184 = vst [vmem:[#allocation2 + $0x19] sm:$0x1] %v183
    %s185 = sld [smem:[#allocation3 + $0x103]]
    %s186 = scalar_lea.vmem [#allocation7], %s185
    %v187 = vld [vmem:[%s186] sm:$0x1]
    %188 = vst [vmem:[#allocation2 + $0x1a] sm:$0x1] %v187
    %s189 = sld [smem:[#allocation3 + $0x183]]
    %s190 = scalar_lea.vmem [#allocation7], %s189
    %v191 = vld [vmem:[%s190] sm:$0x1]
    %192 = vst [vmem:[#allocation2 + $0x1b] sm:$0x1] %v191
    %s193 = sld [smem:[#allocation3 + $0x183]]
    %s194 = scalar_lea.vmem [#allocation7], %s193
    %v195 = vld [vmem:[%s194] sm:$0x1]
    %196 = vst [vmem:[#allocation2 + $0x1c] sm:$0x1] %v195
    %s197 = sld [smem:[#allocation3 + $0x183]]
    %s198 = scalar_lea.vmem [#allocation7], %s197
    %v199 = vld [vmem:[%s198] sm:$0x1]
    %200 = vst [vmem:[#allocation2 + $0x1d] sm:$0x1] %v199
    %s201 = sld [smem:[#allocation3 + $0x183]]
    %s202 = scalar_lea.vmem [#allocation7], %s201
    %v203 = vld [vmem:[%s202] sm:$0x1]
    %204 = vst [vmem:[#allocation2 + $0x1e] sm:$0x1] %v203
    %s205 = sld [smem:[#allocation3 + $0x183]]
    %s206 = scalar_lea.vmem [#allocation7], %s205
    %v207 = vld [vmem:[%s206] sm:$0x1]
    %208 = vst [vmem:[#allocation2 + $0x1f] sm:$0x1] %v207
    %s209 = sld [smem:[#allocation3 + $0x4]]
    %s210 = scalar_lea.vmem [#allocation7], %s209
    %v211 = vld [vmem:[%s210] sm:$0x1]
    %212 = vst [vmem:[#allocation2 + $0x20] sm:$0x1] %v211
    %s213 = sld [smem:[#allocation3 + $0x84]]
    %s214 = scalar_lea.vmem [#allocation7], %s213
    %v215 = vld [vmem:[%s214] sm:$0x1]
    %216 = vst [vmem:[#allocation2 + $0x21] sm:$0x1] %v215
    %s217 = sld [smem:[#allocation3 + $0x104]]
    %s218 = scalar_lea.vmem [#allocation7], %s217
    %v219 = vld [vmem:[%s218] sm:$0x1]
    %220 = vst [vmem:[#allocation2 + $0x22] sm:$0x1] %v219
    %s221 = sld [smem:[#allocation3 + $0x184]]
    %s222 = scalar_lea.vmem [#allocation7], %s221
    %v223 = vld [vmem:[%s222] sm:$0x1]
    %224 = vst [vmem:[#allocation2 + $0x23] sm:$0x1] %v223
    %s225 = sld [smem:[#allocation3 + $0x184]]
    %s226 = scalar_lea.vmem [#allocation7], %s225
    %v227 = vld [vmem:[%s226] sm:$0x1]
    %228 = vst [vmem:[#allocation2 + $0x24] sm:$0x1] %v227
    %s229 = sld [smem:[#allocation3 + $0x184]]
    %s230 = scalar_lea.vmem [#allocation7], %s229
    %v231 = vld [vmem:[%s230] sm:$0x1]
    %232 = vst [vmem:[#allocation2 + $0x25] sm:$0x1] %v231
    %s233 = sld [smem:[#allocation3 + $0x184]]
    %s234 = scalar_lea.vmem [#allocation7], %s233
    %v235 = vld [vmem:[%s234] sm:$0x1]
    %236 = vst [vmem:[#allocation2 + $0x26] sm:$0x1] %v235
    %s237 = sld [smem:[#allocation3 + $0x184]]
    %s238 = scalar_lea.vmem [#allocation7], %s237
    %v239 = vld [vmem:[%s238] sm:$0x1]
    %240 = vst [vmem:[#allocation2 + $0x27] sm:$0x1] %v239
    %s241 = sld [smem:[#allocation3 + $0x5]]
    %s242 = scalar_lea.vmem [#allocation7], %s241
    %v243 = vld [vmem:[%s242] sm:$0x1]
    %244 = vst [vmem:[#allocation2 + $0x28] sm:$0x1] %v243
    %s245 = sld [smem:[#allocation3 + $0x85]]
    %s246 = scalar_lea.vmem [#allocation7], %s245
    %v247 = vld [vmem:[%s246] sm:$0x1]
    %248 = vst [vmem:[#allocation2 + $0x29] sm:$0x1] %v247
    %s249 = sld [smem:[#allocation3 + $0x105]]
    %s250 = scalar_lea.vmem [#allocation7], %s249
    %v251 = vld [vmem:[%s250] sm:$0x1]
    %252 = vst [vmem:[#allocation2 + $0x2a] sm:$0x1] %v251
    %s253 = sld [smem:[#allocation3 + $0x185]]
    %s254 = scalar_lea.vmem [#allocation7], %s253
    %v255 = vld [vmem:[%s254] sm:$0x1]
    %256 = vst [vmem:[#allocation2 + $0x2b] sm:$0x1] %v255
    %s257 = sld [smem:[#allocation3 + $0x185]]
    %s258 = scalar_lea.vmem [#allocation7], %s257
    %v259 = vld [vmem:[%s258] sm:$0x1]
    %260 = vst [vmem:[#allocation2 + $0x2c] sm:$0x1] %v259
    %s261 = sld [smem:[#allocation3 + $0x185]]
    %s262 = scalar_lea.vmem [#allocation7], %s261
    %v263 = vld [vmem:[%s262] sm:$0x1]
    %264 = vst [vmem:[#allocation2 + $0x2d] sm:$0x1] %v263
    %s265 = sld [smem:[#allocation3 + $0x185]]
    %s266 = scalar_lea.vmem [#allocation7], %s265
    %v267 = vld [vmem:[%s266] sm:$0x1]
    %268 = vst [vmem:[#allocation2 + $0x2e] sm:$0x1] %v267
    %s269 = sld [smem:[#allocation3 + $0x185]]
    %s270 = scalar_lea.vmem [#allocation7], %s269
    %v271 = vld [vmem:[%s270] sm:$0x1]
    %272 = vst [vmem:[#allocation2 + $0x2f] sm:$0x1] %v271
    %s273 = sld [smem:[#allocation3 + $0x6]]
    %s274 = scalar_lea.vmem [#allocation7], %s273
    %v275 = vld [vmem:[%s274] sm:$0x1]
    %276 = vst [vmem:[#allocation2 + $0x30] sm:$0x1] %v275
    %s277 = sld [smem:[#allocation3 + $0x86]]
    %s278 = scalar_lea.vmem [#allocation7], %s277
    %v279 = vld [vmem:[%s278] sm:$0x1]
    %280 = vst [vmem:[#allocation2 + $0x31] sm:$0x1] %v279
    %s281 = sld [smem:[#allocation3 + $0x106]]
    %s282 = scalar_lea.vmem [#allocation7], %s281
    %v283 = vld [vmem:[%s282] sm:$0x1]
    %284 = vst [vmem:[#allocation2 + $0x32] sm:$0x1] %v283
    %s285 = sld [smem:[#allocation3 + $0x186]]
    %s286 = scalar_lea.vmem [#allocation7], %s285
    %v287 = vld [vmem:[%s286] sm:$0x1]
    %288 = vst [vmem:[#allocation2 + $0x33] sm:$0x1] %v287
    %s289 = sld [smem:[#allocation3 + $0x186]]
    %s290 = scalar_lea.vmem [#allocation7], %s289
    %v291 = vld [vmem:[%s290] sm:$0x1]
    %292 = vst [vmem:[#allocation2 + $0x34] sm:$0x1] %v291
    %s293 = sld [smem:[#allocation3 + $0x186]]
    %s294 = scalar_lea.vmem [#allocation7], %s293
    %v295 = vld [vmem:[%s294] sm:$0x1]
    %296 = vst [vmem:[#allocation2 + $0x35] sm:$0x1] %v295
    %s297 = sld [smem:[#allocation3 + $0x186]]
    %s298 = scalar_lea.vmem [#allocation7], %s297
    %v299 = vld [vmem:[%s298] sm:$0x1]
    %300 = vst [vmem:[#allocation2 + $0x36] sm:$0x1] %v299
    %s301 = sld [smem:[#allocation3 + $0x186]]
    %s302 = scalar_lea.vmem [#allocation7], %s301
    %v303 = vld [vmem:[%s302] sm:$0x1]
    %304 = vst [vmem:[#allocation2 + $0x37] sm:$0x1] %v303
    %s305 = sld [smem:[#allocation3 + $0x7]]
    %s306 = scalar_lea.vmem [#allocation7], %s305
    %v307 = vld [vmem:[%s306] sm:$0x1]
    %308 = vst [vmem:[#allocation2 + $0x38] sm:$0x1] %v307
    %s309 = sld [smem:[#allocation3 + $0x87]]
    %s310 = scalar_lea.vmem [#allocation7], %s309
    %v311 = vld [vmem:[%s310] sm:$0x1]
    %312 = vst [vmem:[#allocation2 + $0x39] sm:$0x1] %v311
    %s313 = sld [smem:[#allocation3 + $0x107]]
    %s314 = scalar_lea.vmem [#allocation7], %s313
    %v315 = vld [vmem:[%s314] sm:$0x1]
    %316 = vst [vmem:[#allocation2 + $0x3a] sm:$0x1] %v315
    %s317 = sld [smem:[#allocation3 + $0x187]]
    %s318 = scalar_lea.vmem [#allocation7], %s317
    %v319 = vld [vmem:[%s318] sm:$0x1]
    %320 = vst [vmem:[#allocation2 + $0x3b] sm:$0x1] %v319
    %s321 = sld [smem:[#allocation3 + $0x187]]
    %s322 = scalar_lea.vmem [#allocation7], %s321
    %v323 = vld [vmem:[%s322] sm:$0x1]
    %324 = vst [vmem:[#allocation2 + $0x3c] sm:$0x1] %v323
    %s325 = sld [smem:[#allocation3 + $0x187]]
    %s326 = scalar_lea.vmem [#allocation7], %s325
    %v327 = vld [vmem:[%s326] sm:$0x1]
    %328 = vst [vmem:[#allocation2 + $0x3d] sm:$0x1] %v327
    %s329 = sld [smem:[#allocation3 + $0x187]]
    %s330 = scalar_lea.vmem [#allocation7], %s329
    %v331 = vld [vmem:[%s330] sm:$0x1]
    %332 = vst [vmem:[#allocation2 + $0x3e] sm:$0x1] %v331
    %s333 = sld [smem:[#allocation3 + $0x187]]
    %s334 = scalar_lea.vmem [#allocation7], %s333
    %v335 = vld [vmem:[%s334] sm:$0x1]
    %336 = vst [vmem:[#allocation2 + $0x3f] sm:$0x1] %v335
    %v337 = vld [vmem:[#allocation8] sm:$0xff]
    %v338 = vld [vmem:[#allocation8 + $0x8] sm:$0xff]
    %v339 = vld [vmem:[#allocation8 + $0x10] sm:$0xff]
    %v340 = vld [vmem:[#allocation8 + $0x18] sm:$0xff]
    %v341 = vld [vmem:[#allocation2] sm:$0xff]
    %vm342 = vcmask 261120
    %v344 = vsel %vm342, 0.0, 0
    %346 = vmatpush.msra.mxu0 0.0
    %347 = vmatpush.msra.mxu0 0.0
    %348 = vmatpush.msra.mxu0 0.0
    %349 = vmatpush.msra.mxu0 0.0
    %350 = vmatpush.msra.mxu0 0.0
    %351 = vmatpush.msra.mxu0 0.0
    %352 = vmatpush.msra.mxu0 0.0
    %353 = vmatpush.msra.mxu0 0.0
    %354 = vmatpush.msra.mxu0 0.0
    %355 = vmatpush.msra.mxu0 0.0
    %356 = vmatpush.msra.mxu0 0.0
    %357 = vmatpush.msra.mxu0 0.0
    %358 = vmatpush.msra.mxu0 %v340
    %359 = vmatpush.msra.mxu0 %v339
    %360 = vmatpush.msra.mxu0 %v338
    %361 = vmatpush.msra.mxu0 %v337
    %362 = vmatmul.f32.gmra.mxu0 %v344
    %v363 = vpop.f32.mrf.mxu0
    %v364 = vadd.f32 0.0, %v363
    %365 = vdwg.mxu0
    %v366 = vadd.f32 %v341, %v364
    %v367 = vtanh.pop %v366
    %v368 = vmul.f32 %v367, 0.5
    %v369 = vadd.f32 %v368, 0.5
    %v370 = vmul.f32 %v369, 0.0
    %372 = vrot.lane.b32.xlu0 %v367, 64
    %v373 = vpop.permute.xlu0 %372
    %v375 = vmul.f32 %v369, %v373
    %377 = vrot.lane.b32.xlu0 %v375, 32
    %v378 = vpop.permute.xlu0 %377
    %v380 = vadd.f32 %v370, %v378
    %v381 = vtanh.pop %v380
    %383 = vrot.lane.b32.xlu0 %v381, 64
    %v384 = vpop.permute.xlu0 %383
    %v386 = vmul.f32 %v369, %v384
    %v387 = vld [vmem:[#allocation2 + $0x8] sm:$0xff]
    %389 = vrot.lane.b32.xlu0 %v386, 32
    %v390 = vpop.permute.xlu0 %389
    %v391 = vsel %vm342, %v390, 0
    %393 = vmatpush.msra.mxu0 0.0
    %394 = vmatpush.msra.mxu0 0.0
    %395 = vmatpush.msra.mxu0 0.0
    %396 = vmatpush.msra.mxu0 0.0
    %397 = vmatpush.msra.mxu0 0.0
    %398 = vmatpush.msra.mxu0 0.0
    %399 = vmatpush.msra.mxu0 0.0
    %400 = vmatpush.msra.mxu0 0.0
    %401 = vmatpush.msra.mxu0 0.0
    %402 = vmatpush.msra.mxu0 0.0
    %403 = vmatpush.msra.mxu0 0.0
    %404 = vmatpush.msra.mxu0 0.0
    %405 = vmatpush.msra.mxu0 %v340
    %406 = vmatpush.msra.mxu0 %v339
    %407 = vmatpush.msra.mxu0 %v338
    %408 = vmatpush.msra.mxu0 %v337
    %409 = vmatmul.f32.gmra.mxu0 %v391
    %v410 = vpop.f32.mrf.mxu0
    %v411 = vadd.f32 0.0, %v410
    %412 = vdwg.mxu0
    %v413 = vadd.f32 %v387, %v411
    %v414 = vtanh.pop %v413
    %v415 = vmul.f32 %v414, 0.5
    %v416 = vadd.f32 %v415, 0.5
    %v417 = vmul.f32 %v416, %v380
    %419 = vrot.lane.b32.xlu0 %v414, 64
    %v420 = vpop.permute.xlu0 %419
    %v422 = vmul.f32 %v416, %v420
    %424 = vrot.lane.b32.xlu0 %v422, 32
    %v425 = vpop.permute.xlu0 %424
    %v427 = vadd.f32 %v417, %v425
    %v428 = vtanh.pop %v427
    %430 = vrot.lane.b32.xlu0 %v428, 64
    %v431 = vpop.permute.xlu0 %430
    %v433 = vmul.f32 %v416, %v431
    %v434 = vld [vmem:[#allocation2 + $0x10] sm:$0xff]
    %436 = vrot.lane.b32.xlu0 %v433, 32
    %v437 = vpop.permute.xlu0 %436
    %v438 = vsel %vm342, %v437, 0
    %440 = vmatpush.msra.mxu0 0.0
    %441 = vmatpush.msra.mxu0 0.0
    %442 = vmatpush.msra.mxu0 0.0
    %443 = vmatpush.msra.mxu0 0.0
    %444 = vmatpush.msra.mxu0 0.0
    %445 = vmatpush.msra.mxu0 0.0
    %446 = vmatpush.msra.mxu0 0.0
    %447 = vmatpush.msra.mxu0 0.0
    %448 = vmatpush.msra.mxu0 0.0
    %449 = vmatpush.msra.mxu0 0.0
    %450 = vmatpush.msra.mxu0 0.0
    %451 = vmatpush.msra.mxu0 0.0
    %452 = vmatpush.msra.mxu0 %v340
    %453 = vmatpush.msra.mxu0 %v339
    %454 = vmatpush.msra.mxu0 %v338
    %455 = vmatpush.msra.mxu0 %v337
    %456 = vmatmul.f32.gmra.mxu0 %v438
    %v457 = vpop.f32.mrf.mxu0
    %v458 = vadd.f32 0.0, %v457
    %459 = vdwg.mxu0
    %v460 = vadd.f32 %v434, %v458
    %v461 = vtanh.pop %v460
    %v462 = vmul.f32 %v461, 0.5
    %v463 = vadd.f32 %v462, 0.5
    %v464 = vmul.f32 %v463, %v427
    %466 = vrot.lane.b32.xlu0 %v461, 64
    %v467 = vpop.permute.xlu0 %466
    %v469 = vmul.f32 %v463, %v467
    %471 = vrot.lane.b32.xlu0 %v469, 32
    %v472 = vpop.permute.xlu0 %471
    %v474 = vadd.f32 %v464, %v472
    %v475 = vtanh.pop %v474
    %477 = vrot.lane.b32.xlu0 %v475, 64
    %v478 = vpop.permute.xlu0 %477
    %v480 = vmul.f32 %v463, %v478
    %v481 = vld [vmem:[#allocation2 + $0x18] sm:$0xff]
    %483 = vrot.lane.b32.xlu0 %v480, 32
    %v484 = vpop.permute.xlu0 %483
    %v485 = vsel %vm342, %v484, 0
    %487 = vmatpush.msra.mxu0 0.0
    %488 = vmatpush.msra.mxu0 0.0
    %489 = vmatpush.msra.mxu0 0.0
    %490 = vmatpush.msra.mxu0 0.0
    %491 = vmatpush.msra.mxu0 0.0
    %492 = vmatpush.msra.mxu0 0.0
    %493 = vmatpush.msra.mxu0 0.0
    %494 = vmatpush.msra.mxu0 0.0
    %495 = vmatpush.msra.mxu0 0.0
    %496 = vmatpush.msra.mxu0 0.0
    %497 = vmatpush.msra.mxu0 0.0
    %498 = vmatpush.msra.mxu0 0.0
    %499 = vmatpush.msra.mxu0 %v340
    %500 = vmatpush.msra.mxu0 %v339
    %501 = vmatpush.msra.mxu0 %v338
    %502 = vmatpush.msra.mxu0 %v337
    %503 = vmatmul.f32.gmra.mxu0 %v485
    %v504 = vpop.f32.mrf.mxu0
    %v505 = vadd.f32 0.0, %v504
    %506 = vdwg.mxu0
    %v507 = vadd.f32 %v481, %v505
    %v508 = vtanh.pop %v507
    %v509 = vmul.f32 %v508, 0.5
    %v510 = vadd.f32 %v509, 0.5
    %v511 = vmul.f32 %v510, %v474
    %513 = vrot.lane.b32.xlu0 %v508, 64
    %v514 = vpop.permute.xlu0 %513
    %v516 = vmul.f32 %v510, %v514
    %518 = vrot.lane.b32.xlu0 %v516, 32
    %v519 = vpop.permute.xlu0 %518
    %v521 = vadd.f32 %v511, %v519
    %v522 = vtanh.pop %v521
    %524 = vrot.lane.b32.xlu0 %v522, 64
    %v525 = vpop.permute.xlu0 %524
    %v527 = vmul.f32 %v510, %v525
    %v528 = vld [vmem:[#allocation2 + $0x20] sm:$0xff]
    %530 = vrot.lane.b32.xlu0 %v527, 32
    %v531 = vpop.permute.xlu0 %530
    %v532 = vsel %vm342, %v531, 0
    %534 = vmatpush.msra.mxu0 0.0
    %535 = vmatpush.msra.mxu0 0.0
    %536 = vmatpush.msra.mxu0 0.0
    %537 = vmatpush.msra.mxu0 0.0
    %538 = vmatpush.msra.mxu0 0.0
    %539 = vmatpush.msra.mxu0 0.0
    %540 = vmatpush.msra.mxu0 0.0
    %541 = vmatpush.msra.mxu0 0.0
    %542 = vmatpush.msra.mxu0 0.0
    %543 = vmatpush.msra.mxu0 0.0
    %544 = vmatpush.msra.mxu0 0.0
    %545 = vmatpush.msra.mxu0 0.0
    %546 = vmatpush.msra.mxu0 %v340
    %547 = vmatpush.msra.mxu0 %v339
    %548 = vmatpush.msra.mxu0 %v338
    %549 = vmatpush.msra.mxu0 %v337
    %550 = vmatmul.f32.gmra.mxu0 %v532
    %v551 = vpop.f32.mrf.mxu0
    %v552 = vadd.f32 0.0, %v551
    %553 = vdwg.mxu0
    %v554 = vadd.f32 %v528, %v552
    %v555 = vtanh.pop %v554
    %v556 = vmul.f32 %v555, 0.5
    %v557 = vadd.f32 %v556, 0.5
    %v558 = vmul.f32 %v557, %v521
    %560 = vrot.lane.b32.xlu0 %v555, 64
    %v561 = vpop.permute.xlu0 %560
    %v563 = vmul.f32 %v557, %v561
    %565 = vrot.lane.b32.xlu0 %v563, 32
    %v566 = vpop.permute.xlu0 %565
    %v568 = vadd.f32 %v558, %v566
    %v569 = vtanh.pop %v568
    %571 = vrot.lane.b32.xlu0 %v569, 64
    %v572 = vpop.permute.xlu0 %571
    %v574 = vmul.f32 %v557, %v572
    %v575 = vld [vmem:[#allocation2 + $0x28] sm:$0xff]
    %577 = vrot.lane.b32.xlu0 %v574, 32
    %v578 = vpop.permute.xlu0 %577
    %v579 = vsel %vm342, %v578, 0
    %581 = vmatpush.msra.mxu0 0.0
    %582 = vmatpush.msra.mxu0 0.0
    %583 = vmatpush.msra.mxu0 0.0
    %584 = vmatpush.msra.mxu0 0.0
    %585 = vmatpush.msra.mxu0 0.0
    %586 = vmatpush.msra.mxu0 0.0
    %587 = vmatpush.msra.mxu0 0.0
    %588 = vmatpush.msra.mxu0 0.0
    %589 = vmatpush.msra.mxu0 0.0
    %590 = vmatpush.msra.mxu0 0.0
    %591 = vmatpush.msra.mxu0 0.0
    %592 = vmatpush.msra.mxu0 0.0
    %593 = vmatpush.msra.mxu0 %v340
    %594 = vmatpush.msra.mxu0 %v339
    %595 = vmatpush.msra.mxu0 %v338
    %596 = vmatpush.msra.mxu0 %v337
    %597 = vmatmul.f32.gmra.mxu0 %v579
    %v598 = vpop.f32.mrf.mxu0
    %v599 = vadd.f32 0.0, %v598
    %600 = vdwg.mxu0
    %v601 = vadd.f32 %v575, %v599
    %v602 = vtanh.pop %v601
    %v603 = vmul.f32 %v602, 0.5
    %v604 = vadd.f32 %v603, 0.5
    %v605 = vmul.f32 %v604, %v568
    %607 = vrot.lane.b32.xlu0 %v602, 64
    %v608 = vpop.permute.xlu0 %607
    %v610 = vmul.f32 %v604, %v608
    %612 = vrot.lane.b32.xlu0 %v610, 32
    %v613 = vpop.permute.xlu0 %612
    %v615 = vadd.f32 %v605, %v613
    %v616 = vtanh.pop %v615
    %618 = vrot.lane.b32.xlu0 %v616, 64
    %v619 = vpop.permute.xlu0 %618
    %v621 = vmul.f32 %v604, %v619
    %v622 = vld [vmem:[#allocation2 + $0x30] sm:$0xff]
    %624 = vrot.lane.b32.xlu0 %v621, 32
    %v625 = vpop.permute.xlu0 %624
    %v626 = vsel %vm342, %v625, 0
    %628 = vmatpush.msra.mxu0 0.0
    %629 = vmatpush.msra.mxu0 0.0
    %630 = vmatpush.msra.mxu0 0.0
    %631 = vmatpush.msra.mxu0 0.0
    %632 = vmatpush.msra.mxu0 0.0
    %633 = vmatpush.msra.mxu0 0.0
    %634 = vmatpush.msra.mxu0 0.0
    %635 = vmatpush.msra.mxu0 0.0
    %636 = vmatpush.msra.mxu0 0.0
    %637 = vmatpush.msra.mxu0 0.0
    %638 = vmatpush.msra.mxu0 0.0
    %639 = vmatpush.msra.mxu0 0.0
    %640 = vmatpush.msra.mxu0 %v340
    %641 = vmatpush.msra.mxu0 %v339
    %642 = vmatpush.msra.mxu0 %v338
    %643 = vmatpush.msra.mxu0 %v337
    %644 = vmatmul.f32.gmra.mxu0 %v626
    %v645 = vpop.f32.mrf.mxu0
    %v646 = vadd.f32 0.0, %v645
    %647 = vdwg.mxu0
    %v648 = vadd.f32 %v622, %v646
    %v649 = vtanh.pop %v648
    %v650 = vmul.f32 %v649, 0.5
    %v651 = vadd.f32 %v650, 0.5
    %v652 = vmul.f32 %v651, %v615
    %654 = vrot.lane.b32.xlu0 %v649, 64
    %v655 = vpop.permute.xlu0 %654
    %v657 = vmul.f32 %v651, %v655
    %659 = vrot.lane.b32.xlu0 %v657, 32
    %v660 = vpop.permute.xlu0 %659
    %v662 = vadd.f32 %v652, %v660
    %v663 = vtanh.pop %v662
    %665 = vrot.lane.b32.xlu0 %v663, 64
    %v666 = vpop.permute.xlu0 %665
    %v668 = vmul.f32 %v651, %v666
    %v669 = vld [vmem:[#allocation2 + $0x38] sm:$0xff]
    %671 = vrot.lane.b32.xlu0 %v668, 32
    %v672 = vpop.permute.xlu0 %671
    %v673 = vsel %vm342, %v672, 0
    %675 = vmatpush.msra.mxu0 0.0
    %676 = vmatpush.msra.mxu0 0.0
    %677 = vmatpush.msra.mxu0 0.0
    %678 = vmatpush.msra.mxu0 0.0
    %679 = vmatpush.msra.mxu0 0.0
    %680 = vmatpush.msra.mxu0 0.0
    %681 = vmatpush.msra.mxu0 0.0
    %682 = vmatpush.msra.mxu0 0.0
    %683 = vmatpush.msra.mxu0 0.0
    %684 = vmatpush.msra.mxu0 0.0
    %685 = vmatpush.msra.mxu0 0.0
    %686 = vmatpush.msra.mxu0 0.0
    %687 = vmatpush.msra.mxu0 %v340
    %688 = vmatpush.msra.mxu0 %v339
    %689 = vmatpush.msra.mxu0 %v338
    %690 = vmatpush.msra.mxu0 %v337
    %691 = vmatmul.f32.gmra.mxu0 %v673
    %v692 = vpop.f32.mrf.mxu0
    %v693 = vadd.f32 0.0, %v692
    %694 = vdwg.mxu0
    %v695 = vadd.f32 %v669, %v693
    %v696 = vtanh.pop %v695
    %v697 = vmul.f32 %v696, 0.5
    %v698 = vadd.f32 %v697, 0.5
    %v699 = vmul.f32 %v698, %v662
    %701 = vrot.lane.b32.xlu0 %v696, 64
    %v702 = vpop.permute.xlu0 %701
    %v704 = vmul.f32 %v698, %v702
    %706 = vrot.lane.b32.xlu0 %v704, 32
    %v707 = vpop.permute.xlu0 %706
    %v709 = vadd.f32 %v699, %v707
    %v710 = vtanh.pop %v709
    %712 = vrot.lane.b32.xlu0 %v710, 64
    %v713 = vpop.permute.xlu0 %712
    %v715 = vmul.f32 %v698, %v713
    %v716 = vmax.f32 %v715, 0.0
    %v717 = vld [vmem:[#allocation10] sm:$0xff]
    %v718 = vld [vmem:[#allocation10 + $0x8] sm:$0xff]
    %v719 = vld [vmem:[#allocation10 + $0x10] sm:$0xff]
    %v720 = vld [vmem:[#allocation10 + $0x18] sm:$0xff]
    %v721 = vld [vmem:[%s4] sm:$0x1]
    %v723 = vperm.slane %v721, 0
    %726 = vrot.lane.b32.xlu0 %v716, 32
    %v727 = vpop.permute.xlu0 %726
    %v728 = vsel %vm342, %v727, 0
    %730 = vmatpush.msra.mxu0 0.0
    %731 = vmatpush.msra.mxu0 0.0
    %732 = vmatpush.msra.mxu0 0.0
    %733 = vmatpush.msra.mxu0 0.0
    %734 = vmatpush.msra.mxu0 0.0
    %735 = vmatpush.msra.mxu0 0.0
    %736 = vmatpush.msra.mxu0 0.0
    %737 = vmatpush.msra.mxu0 0.0
    %738 = vmatpush.msra.mxu0 0.0
    %739 = vmatpush.msra.mxu0 0.0
    %740 = vmatpush.msra.mxu0 0.0
    %741 = vmatpush.msra.mxu0 0.0
    %742 = vmatpush.msra.mxu0 %v720
    %743 = vmatpush.msra.mxu0 %v719
    %744 = vmatpush.msra.mxu0 %v718
    %745 = vmatpush.msra.mxu0 %v717
    %746 = vmatmul.f32.gmra.mxu0 %v728
    %v747 = vpop.f32.mrf.mxu0
    %v748 = vadd.f32 %v723, %v747
    %749 = vdwg.mxu0
    %750 = vst [vmem:[#allocation11] sm:$0xff] %v748
    // Predicated region
    $region38: #{tpu_custom_call.1} parent=1 // pred_check
      _
    $region39: #{tpu_custom_call.1} parent=1 // pred_check_branch
      %752 = sbr.rel (0) target = $region41
    $region40: #{tpu_custom_call.1} parent=1 // pred_region
      %754 = vsyncadd [#allocation5], 0
      %s756 = sshll.u32 [#allocation11], 4
      %s757 = int_to_ptr.vmem [resolvable:$true] %s756
      %s758 = sshll.u32 %s5, 4
      %s759 = int_to_ptr.hbm [resolvable:$true] %s758
      %761 = dma.vmem_to_hbm [thread:$0]  %s757, 128, %s759, [#allocation5]
    $region41: #{tpu_custom_call.1} parent=1 // pred_fallthru
      _
    // Predicated region
    $region42: #{tpu_custom_call.1} parent=1 // pred_check
      _
    $region43: #{tpu_custom_call.1} parent=1 // pred_check_branch
      %763 = sbr.rel (0) target = $region45
    $region44: #{tpu_custom_call.1} parent=1 // pred_region
      %765 = dma.done [#allocation5], 128
    $region45: #{tpu_custom_call.1} parent=1 // pred_fallthru
      _
    %766 = vsyncpa [#allocation4], 1
    %767 = vsyncpa [#allocation9], 1
    %768 = vsyncpa [#allocation5], 1
    %769 = vsyncpa [#allocation6], 1

</llo_original>
